<compile_context>
chip_gen: v6e
topology: v6e:2x2x1
jax: 0.10.0
libtpu: 0.0.40
codegen_flags: <defaults>
</compile_context>

<pallas_src>
import functools

import jax
import jax.numpy as jnp
from jax.experimental import pallas as pl
from jax.experimental.pallas import tpu as pltpu


_ARB = pltpu.CompilerParams(dimension_semantics=("arbitrary",))
_PAR = pltpu.CompilerParams(dimension_semantics=("parallel",))


def _full_spec(shape):
    n = len(shape)
    return pl.BlockSpec(shape, lambda i: (0,) * n)


# ---------------------------------------------------------------------------
# Pallas kernels
# ---------------------------------------------------------------------------
def _matmul_act_kernel(x_ref, w_ref, b_ref, o_ref, *, act, slope):
    """y = act(x @ w + b)  (BN already folded into w, b)."""
    y = jnp.dot(x_ref[...], w_ref[...], preferred_element_type=jnp.float32)
    y = y + b_ref[...]
    if act == "relu":
        y = jnp.maximum(y, 0.0)
    elif act == "leaky_relu":
        y = jnp.maximum(y, slope * y)
    o_ref[...] = y.astype(o_ref.dtype)


def _maxpool3x3_dense_kernel(x_ref, o_ref):
    """Dense (stride-1) 3x3 max over a padded NHWC block, all in VMEM."""
    x = x_ref[...]
    oh = o_ref.shape[1]
    ow = o_ref.shape[2]
    r = x[:, 0:oh, 0:ow, :]
    for di in range(3):
        for dj in range(3):
            if di == 0 and dj == 0:
                continue
            r = jnp.maximum(r, x[:, di:di + oh, dj:dj + ow, :])
    o_ref[...] = r.astype(o_ref.dtype)


def _c1_ds_kernel(x_ref, w1_ref, b1_ref, wd_ref, bd_ref, y1_ref, s_ref):
    """Merged bottleneck 1x1 conv (ReLU) + downsample 1x1 conv: one read of X."""
    x = x_ref[...]
    y1 = jnp.dot(x, w1_ref[...], preferred_element_type=jnp.float32) + b1_ref[...]
    y1_ref[...] = jnp.maximum(y1, 0.0).astype(y1_ref.dtype)
    s = jnp.dot(x, wd_ref[...], preferred_element_type=jnp.float32) + bd_ref[...]
    s_ref[...] = s.astype(s_ref.dtype)


def _bottleneck_tail_kernel(cols_ref, w2_ref, b2_ref, w3_ref, b3_ref,
                            s_ref, pool_ref, feat_ref):
    """c2(3x3, ReLU) -> c3(1x1) -> +shortcut -> ReLU -> global avg-pool.

    The average pool is expressed as a tiny matmul against a pooling matrix so
    everything stays as MXU/VPU work on VMEM-resident values (no HBM round
    trips between the residual add and the pooled features)."""
    y2 = jnp.dot(cols_ref[...], w2_ref[...],
                 preferred_element_type=jnp.float32) + b2_ref[...]
    y2 = jnp.maximum(y2, 0.0)
    y3 = jnp.dot(y2.astype(jnp.bfloat16), w3_ref[...],
                 preferred_element_type=jnp.float32) + b3_ref[...]
    z = jnp.maximum(y3 + s_ref[...], 0.0)
    feat_ref[...] = jnp.dot(pool_ref[...], z,
                            preferred_element_type=jnp.float32).astype(feat_ref.dtype)


def _fc_head_kernel(x_ref, w1_ref, b1_ref, w2_ref, b2_ref, w3_ref, b3_ref,
                    o_ref, *, slope):
    """target_fc head: (Linear+foldedBN+LeakyReLU) x2 -> Linear, one kernel."""
    h = jnp.dot(x_ref[...], w1_ref[...],
                preferred_element_type=jnp.float32) + b1_ref[...]
    h = jnp.maximum(h, slope * h)
    h = jnp.dot(h.astype(jnp.bfloat16), w2_ref[...],
                preferred_element_type=jnp.float32) + b2_ref[...]
    h = jnp.maximum(h, slope * h)
    o = jnp.dot(h.astype(jnp.bfloat16), w3_ref[...],
                preferred_element_type=jnp.float32) + b3_ref[...]
    o_ref[...] = o.astype(o_ref.dtype)


# ---------------------------------------------------------------------------
# pallas_call wrappers
# ---------------------------------------------------------------------------
def fused_matmul_act(x, w, b, *, act="none", slope=0.01, tile_m=256):
    """y = act(x @ w + b), bf16 operands / f32 accumulate, M-tiled grid."""
    M, K = x.shape
    N = w.shape[1]
    tm = M if M <= tile_m else tile_m
    grid = (pl.cdiv(M, tm),)
    kernel = functools.partial(_matmul_act_kernel, act=act, slope=slope)
    return pl.pallas_call(
        kernel,
        grid=grid,
        in_specs=[pl.BlockSpec((tm, K), lambda i: (i, 0)),
                  pl.BlockSpec((K, N), lambda i: (0, 0)),
                  pl.BlockSpec((1, N), lambda i: (0, 0))],
        out_specs=pl.BlockSpec((tm, N), lambda i: (i, 0)),
        out_shape=jax.ShapeDtypeStruct((M, N), jnp.float32),
        compiler_params=_PAR,
    )(x.astype(jnp.bfloat16), w.astype(jnp.bfloat16),
      b.reshape(1, N).astype(jnp.float32))


def maxpool_3x3_s2_p1(x):
    """MaxPool2d(kernel=3, stride=2, padding=1) on NHWC input."""
    B, H, W, C = x.shape
    xp = jnp.pad(x, ((0, 0), (1, 1), (1, 1), (0, 0)),
                 constant_values=-jnp.inf)  # every window has >=1 real element
    hd, wd = H, W  # dense (stride-1) output extent: (H+2) - 3 + 1
    dense = pl.pallas_call(
        _maxpool3x3_dense_kernel,
        grid=(1,),
        in_specs=[_full_spec(xp.shape)],
        out_specs=_full_spec((B, hd, wd, C)),
        out_shape=jax.ShapeDtypeStruct((B, hd, wd, C), jnp.float32),
        compiler_params=_ARB,
    )(xp.astype(jnp.float32))
    return dense[:, ::2, ::2, :]  # stride-2 subsample (wrapper glue)


def bottleneck_block_and_pool(x, fp):
    """c1+ds merged kernel, im2col glue, then fused c2/c3/add/ReLU/avg-pool."""
    B, H, W, cin = x.shape
    M = B * H * W
    xm = x.reshape(M, cin).astype(jnp.bfloat16)   # 1x1 convs need no im2col
    n1 = fp["c1_w"].shape[1]
    nd = fp["ds_w"].shape[1]

    # --- merged c1 (1x1, ReLU) + downsample (1x1): one call, one read of X ---
    y1, shortcut = pl.pallas_call(
        _c1_ds_kernel,
        grid=(1,),
        in_specs=[_full_spec((M, cin)),
                  _full_spec(fp["c1_w"].shape), _full_spec(fp["c1_b"].shape),
                  _full_spec(fp["ds_w"].shape), _full_spec(fp["ds_b"].shape)],
        out_specs=(_full_spec((M, n1)), _full_spec((M, nd))),
        out_shape=(jax.ShapeDtypeStruct((M, n1), jnp.bfloat16),
                   jax.ShapeDtypeStruct((M, nd), jnp.float32)),
        compiler_params=_ARB,
    )(xm, fp["c1_w"], fp["c1_b"], fp["ds_w"], fp["ds_b"])

    # --- im2col for the 3x3 conv (XLA glue) ---------------------------------
    # TODO(synk): at real ResNet scale, move im2col in-kernel (halo DMA +
    # kh*kw shifted matmuls) to avoid kh*kw HBM amplification.
    pat, _ = extract_patches(y1.reshape(B, H, W, n1), 3, 3, 1, 1)
    cols = pat.reshape(M, 9 * n1)                 # bf16

    hw = H * W
    pool = jnp.repeat(jnp.eye(B, dtype=jnp.float32), hw, axis=1) / float(hw)

    nout = fp["c3_w"].shape[1]
    feat = pl.pallas_call(
        _bottleneck_tail_kernel,
        grid=(1,),
        in_specs=[_full_spec(cols.shape),
                  _full_spec(fp["c2_w"].shape), _full_spec(fp["c2_b"].shape),
                  _full_spec(fp["c3_w"].shape), _full_spec(fp["c3_b"].shape),
                  _full_spec((M, nout)), _full_spec((B, M))],
        out_specs=_full_spec((B, nout)),
        out_shape=jax.ShapeDtypeStruct((B, nout), jnp.float32),
        compiler_params=_ARB,
    )(cols, fp["c2_w"], fp["c2_b"], fp["c3_w"], fp["c3_b"], shortcut, pool)
    return feat


def fc_head(feat, fp, *, slope=0.01):
    B = feat.shape[0]
    out_dim = fp["fc3_w"].shape[1]
    return pl.pallas_call(
        functools.partial(_fc_head_kernel, slope=slope),
        grid=(1,),
        in_specs=[_full_spec(feat.shape),
                  _full_spec(fp["fc1_w"].shape), _full_spec(fp["fc1_b"].shape),
                  _full_spec(fp["fc2_w"].shape), _full_spec(fp["fc2_b"].shape),
                  _full_spec(fp["fc3_w"].shape), _full_spec(fp["fc3_b"].shape)],
        out_specs=_full_spec((B, out_dim)),
        out_shape=jax.ShapeDtypeStruct((B, out_dim), jnp.float32),
        compiler_params=_ARB,
    )(feat.astype(jnp.bfloat16), fp["fc1_w"], fp["fc1_b"],
      fp["fc2_w"], fp["fc2_b"], fp["fc3_w"], fp["fc3_b"])


# ---------------------------------------------------------------------------
# Glue: im2col patch extraction (pure data rearrangement)
# ---------------------------------------------------------------------------
def extract_patches(x, kh, kw, stride, pad):
    """x: [B, H, W, C] -> patches [B, oh, ow, kh*kw, C] (zero padded)."""
    if pad > 0:
        x = jnp.pad(x, ((0, 0), (pad, pad), (pad, pad), (0, 0)))
    B, H, W, C = x.shape
    oh = (H - kh) // stride + 1
    ow = (W - kw) // stride + 1
    cols = []
    for i in range(kh):
        for j in range(kw):
            cols.append(x[:, i:i + stride * (oh - 1) + 1:stride,
                          j:j + stride * (ow - 1) + 1:stride, :])
    patches = jnp.stack(cols, axis=3)
    return patches, (B, oh, ow)


# ---------------------------------------------------------------------------
# Parameter init (deterministic, synthetic) + inference-time BN folding
# ---------------------------------------------------------------------------
def init_params(key):
    ks = jax.random.split(key, 12)

    def conv_w(k, kh, kw, cin, cout):
        std = (2.0 / (kh * kw * cin)) ** 0.5
        return std * jax.random.normal(k, (kh, kw, cin, cout), jnp.float32)

    def xavier(k, fin, fout):  # xavier_normal_ (stored as [in, out] == W.T)
        std = (2.0 / (fin + fout)) ** 0.5
        return std * jax.random.normal(k, (fin, fout), jnp.float32)

    def bn(n):  # (gamma, beta, running_mean, running_var) -- PyTorch defaults
        return (jnp.ones((n,), jnp.float32), jnp.zeros((n,), jnp.float32),
                jnp.zeros((n,), jnp.float32), jnp.ones((n,), jnp.float32))

    p = {}
    # backbone (scaled-down ResNet): stem 3->16, bottleneck 16->(8,8)->32
    p["stem_w"] = conv_w(ks[0], 7, 7, 3, 16);   p["stem_bn"] = bn(16)
    p["c1_w"] = conv_w(ks[1], 1, 1, 16, 8);     p["c1_bn"] = bn(8)
    p["c2_w"] = conv_w(ks[2], 3, 3, 8, 8);      p["c2_bn"] = bn(8)
    p["c3_w"] = conv_w(ks[3], 1, 1, 8, 32);     p["c3_bn"] = bn(32)
    p["ds_w"] = conv_w(ks[4], 1, 1, 16, 32);    p["ds_bn"] = bn(32)
    # target_fc head: Linear -> BN1d -> LeakyReLU -> Dropout  (x2)  -> Linear
    p["fc1_w"] = xavier(ks[5], 32, 64)
    p["fc1_b"] = jax.random.normal(ks[6], (64,), jnp.float32)  # init.normal_
    p["fc1_bn"] = bn(64)
    p["fc2_w"] = xavier(ks[7], 64, 64)
    p["fc2_b"] = jax.random.normal(ks[8], (64,), jnp.float32)
    p["fc2_bn"] = bn(64)
    p["fc3_w"] = xavier(ks[9], 64, 2)
    p["fc3_b"] = jax.random.normal(ks[10], (2,), jnp.float32)
    return p


def fold_params(p, eps=1e-5):
    """Fold eval-mode BatchNorm into weights/biases; cast weights to bf16."""
    def fold(w2d, bn_params, bias=None):
        gamma, beta, mean, var = bn_params
        scale = gamma * jax.lax.rsqrt(var + eps)
        if bias is None:
            bias = jnp.zeros_like(beta)
        w_f = (w2d * scale[None, :]).astype(jnp.bfloat16)
        b_f = ((bias - mean) * scale + beta).reshape(1, -1).astype(jnp.float32)
        return w_f, b_f

    def as_mat(w):  # conv HWIO -> [kh*kw*cin, cout]
        return w.reshape(-1, w.shape[-1])

    fp = {}
    fp["stem_w"], fp["stem_b"] = fold(as_mat(p["stem_w"]), p["stem_bn"])
    fp["c1_w"], fp["c1_b"] = fold(as_mat(p["c1_w"]), p["c1_bn"])
    fp["c2_w"], fp["c2_b"] = fold(as_mat(p["c2_w"]), p["c2_bn"])
    fp["c3_w"], fp["c3_b"] = fold(as_mat(p["c3_w"]), p["c3_bn"])
    fp["ds_w"], fp["ds_b"] = fold(as_mat(p["ds_w"]), p["ds_bn"])
    fp["fc1_w"], fp["fc1_b"] = fold(p["fc1_w"], p["fc1_bn"], p["fc1_b"])
    fp["fc2_w"], fp["fc2_b"] = fold(p["fc2_w"], p["fc2_bn"], p["fc2_b"])
    fp["fc3_w"] = p["fc3_w"].astype(jnp.bfloat16)
    fp["fc3_b"] = p["fc3_b"].reshape(1, -1).astype(jnp.float32)
    return fp


# ---------------------------------------------------------------------------
# Forward pass (5 pallas_calls total)
# ---------------------------------------------------------------------------
def resnet_attr_forward(fp, x_nchw):
    x = jnp.transpose(x_nchw, (0, 2, 3, 1)).astype(jnp.float32)  # NCHW -> NHWC

    # --- backbone stem: conv7x7 s2 p3 (+folded BN) + ReLU --------------------
    patches, (B, oh, ow) = extract_patches(x, 7, 7, 2, 3)
    cols = patches.reshape(B * oh * ow, -1)
    stem = fused_matmul_act(cols, fp["stem_w"], fp["stem_b"], act="relu")
    stem = stem.reshape(B, oh, ow, fp["stem_w"].shape[1])

    # --- maxpool 3x3 s2 p1 (in-VMEM shifted max, no 9x HBM expansion) --------
    x = maxpool_3x3_s2_p1(stem)

    # --- one bottleneck residual block + global average pool -----------------
    feat = bottleneck_block_and_pool(x, fp)   # [B, in_features]

    # --- target_fc head (Dropout = identity in eval mode) --------------------
    return fc_head(feat, fp)                  # [B, target_dim]


if __name__ == "__main__":
    key = jax.random.PRNGKey(0)
    pkey, xkey = jax.random.split(key)
    params = init_params(pkey)
    fparams = fold_params(params)            # one-time inference-mode BN folding
    x = jax.random.normal(xkey, (2, 3, 16, 16), jnp.float32)  # NCHW, like PyTorch

    fwd = jax.jit(resnet_attr_forward)
    out = fwd(fparams, x)
    out = jax.block_until_ready(out)

    assert out.shape == (2, 2), out.shape
    assert bool(jnp.all(jnp.isfinite(out)))
    print("KERNEL_OK")
</pallas_src>

<mosaic_0001>
module attributes {stable_mosaic.version = 11 : i64} {
  func.func @_matmul_act_kernel(%arg0: i32, %arg1: memref<128x147xbf16, #tpu.memory_space<vmem>>, %arg2: memref<147x16xbf16, #tpu.memory_space<vmem>>, %arg3: memref<1x16xf32, #tpu.memory_space<vmem>>, %arg4: memref<128x16xf32, #tpu.memory_space<vmem>>) attributes {dimension_semantics = [#tpu.dimension_semantics<parallel>], iteration_bounds = array<i64: 1>, scalar_prefetch = 0 : i64, scratch_operands = 0 : i64, tpu.core_type = #tpu.core_type<tc>, window_params = [{transform_indices = @transform_0, window_bounds = array<i64: 128, 147>}, {pipeline_mode = #tpu.pipeline_mode<synchronous>, transform_indices = @transform_1, window_bounds = array<i64: 147, 16>}, {pipeline_mode = #tpu.pipeline_mode<synchronous>, transform_indices = @transform_2, window_bounds = array<i64: 1, 16>}, {transform_indices = @transform_3, window_bounds = array<i64: 128, 16>}]} {
    %c0 = arith.constant 0 : index
    %c0_0 = arith.constant 0 : index
    %0 = vector.load %arg1[%c0, %c0_0] : memref<128x147xbf16, #tpu.memory_space<vmem>>, vector<128x147xbf16>
    %c0_1 = arith.constant 0 : index
    %c0_2 = arith.constant 0 : index
    %1 = vector.load %arg2[%c0_1, %c0_2] : memref<147x16xbf16, #tpu.memory_space<vmem>>, vector<147x16xbf16>
    %cst = arith.constant dense<0.000000e+00> : vector<128x16xf32>
    %2 = tpu.matmul %0, %1, %cst {dimension_numbers = #tpu.dot_dimension_numbers<[1], [0], [0], [1], [0, 0, 1, 1], [], []>} : vector<128x147xbf16>, vector<147x16xbf16>, vector<128x16xf32> -> vector<128x16xf32>
    %c0_3 = arith.constant 0 : index
    %c0_4 = arith.constant 0 : index
    %3 = vector.load %arg3[%c0_3, %c0_4] : memref<1x16xf32, #tpu.memory_space<vmem>>, vector<1x16xf32>
    %4 = vector.broadcast %3 : vector<1x16xf32> to vector<128x16xf32>
    %5 = arith.addf %2, %4 : vector<128x16xf32>
    %cst_5 = arith.constant 0.000000e+00 : f32
    %6 = vector.broadcast %cst_5 : f32 to vector<128x16xf32>
    %7 = arith.maximumf %5, %6 : vector<128x16xf32>
    %c0_6 = arith.constant 0 : index
    %c0_7 = arith.constant 0 : index
    %8 = vector.load %arg4[%c0_6, %c0_7] : memref<128x16xf32, #tpu.memory_space<vmem>>, vector<128x16xf32>
    tpu.vector_store %arg4[%c0_6, %c0_7], %7 {strides = array<i32>} : memref<128x16xf32, #tpu.memory_space<vmem>>, vector<128x16xf32>,
    return
  }
  func.func @transform_0(%arg0: i32) -> (i32, i32) {
    %c0_i32 = arith.constant 0 : i32
    %c0_i32_0 = arith.constant 0 : i32
    return %arg0, %c0_i32 : i32, i32
  }
  func.func @transform_1(%arg0: i32) -> (i32, i32) {
    %c0_i32 = arith.constant 0 : i32
    %c0_i32_0 = arith.constant 0 : i32
    %c0_i32_1 = arith.constant 0 : i32
    return %c0_i32, %c0_i32_0 : i32, i32
  }
  func.func @transform_2(%arg0: i32) -> (i32, i32) {
    %c0_i32 = arith.constant 0 : i32
    %c0_i32_0 = arith.constant 0 : i32
    %c0_i32_1 = arith.constant 0 : i32
    return %c0_i32, %c0_i32_0 : i32, i32
  }
  func.func @transform_3(%arg0: i32) -> (i32, i32) {
    %c0_i32 = arith.constant 0 : i32
    %c0_i32_0 = arith.constant 0 : i32
    return %arg0, %c0_i32 : i32, i32
  }
}

module attributes {stable_mosaic.version = 11 : i64} {
  func.func @_maxpool3x3_dense_kernel(%arg0: i32, %arg1: memref<2x10x10x16xf32, #tpu.memory_space<vmem>>, %arg2: memref<2x8x8x16xf32, #tpu.memory_space<vmem>>) attributes {dimension_semantics = [#tpu.dimension_semantics<arbitrary>], iteration_bounds = array<i64: 1>, scalar_prefetch = 0 : i64, scratch_operands = 0 : i64, tpu.core_type = #tpu.core_type<tc>, window_params = [{pipeline_mode = #tpu.pipeline_mode<synchronous>, transform_indices = @transform_0, window_bounds = array<i64: 2, 10, 10, 16>}, {pipeline_mode = #tpu.pipeline_mode<synchronous>, transform_indices = @transform_1, window_bounds = array<i64: 2, 8, 8, 16>}]} {
    %c0 = arith.constant 0 : index
    %c0_0 = arith.constant 0 : index
    %c0_1 = arith.constant 0 : index
    %c0_2 = arith.constant 0 : index
    %0 = vector.load %arg1[%c0, %c0_0, %c0_1, %c0_2] : memref<2x10x10x16xf32, #tpu.memory_space<vmem>>, vector<2x10x10x16xf32>
    %1 = vector.extract_strided_slice %0 {offsets = [0, 0, 0, 0], sizes = [2, 8, 8, 16], strides = [1, 1, 1, 1]} : vector<2x10x10x16xf32> to vector<2x8x8x16xf32>
    %2 = vector.extract_strided_slice %0 {offsets = [0, 0, 1, 0], sizes = [2, 8, 8, 16], strides = [1, 1, 1, 1]} : vector<2x10x10x16xf32> to vector<2x8x8x16xf32>
    %3 = arith.maximumf %1, %2 : vector<2x8x8x16xf32>
    %4 = vector.extract_strided_slice %0 {offsets = [0, 0, 2, 0], sizes = [2, 8, 8, 16], strides = [1, 1, 1, 1]} : vector<2x10x10x16xf32> to vector<2x8x8x16xf32>
    %5 = arith.maximumf %3, %4 : vector<2x8x8x16xf32>
    %6 = vector.extract_strided_slice %0 {offsets = [0, 1, 0, 0], sizes = [2, 8, 8, 16], strides = [1, 1, 1, 1]} : vector<2x10x10x16xf32> to vector<2x8x8x16xf32>
    %7 = arith.maximumf %5, %6 : vector<2x8x8x16xf32>
    %8 = vector.extract_strided_slice %0 {offsets = [0, 1, 1, 0], sizes = [2, 8, 8, 16], strides = [1, 1, 1, 1]} : vector<2x10x10x16xf32> to vector<2x8x8x16xf32>
    %9 = arith.maximumf %7, %8 : vector<2x8x8x16xf32>
    %10 = vector.extract_strided_slice %0 {offsets = [0, 1, 2, 0], sizes = [2, 8, 8, 16], strides = [1, 1, 1, 1]} : vector<2x10x10x16xf32> to vector<2x8x8x16xf32>
    %11 = arith.maximumf %9, %10 : vector<2x8x8x16xf32>
    %12 = vector.extract_strided_slice %0 {offsets = [0, 2, 0, 0], sizes = [2, 8, 8, 16], strides = [1, 1, 1, 1]} : vector<2x10x10x16xf32> to vector<2x8x8x16xf32>
    %13 = arith.maximumf %11, %12 : vector<2x8x8x16xf32>
    %14 = vector.extract_strided_slice %0 {offsets = [0, 2, 1, 0], sizes = [2, 8, 8, 16], strides = [1, 1, 1, 1]} : vector<2x10x10x16xf32> to vector<2x8x8x16xf32>
    %15 = arith.maximumf %13, %14 : vector<2x8x8x16xf32>
    %16 = vector.extract_strided_slice %0 {offsets = [0, 2, 2, 0], sizes = [2, 8, 8, 16], strides = [1, 1, 1, 1]} : vector<2x10x10x16xf32> to vector<2x8x8x16xf32>
    %17 = arith.maximumf %15, %16 : vector<2x8x8x16xf32>
    %c0_3 = arith.constant 0 : index
    %c0_4 = arith.constant 0 : index
    %c0_5 = arith.constant 0 : index
    %c0_6 = arith.constant 0 : index
    %18 = vector.load %arg2[%c0_3, %c0_4, %c0_5, %c0_6] : memref<2x8x8x16xf32, #tpu.memory_space<vmem>>, vector<2x8x8x16xf32>
    tpu.vector_store %arg2[%c0_3, %c0_4, %c0_5, %c0_6], %17 {strides = array<i32>} : memref<2x8x8x16xf32, #tpu.memory_space<vmem>>, vector<2x8x8x16xf32>,
    return
  }
  func.func @transform_0(%arg0: i32) -> (i32, i32, i32, i32) {
    %c0_i32 = arith.constant 0 : i32
    %c0_i32_0 = arith.constant 0 : i32
    %c0_i32_1 = arith.constant 0 : i32
    %c0_i32_2 = arith.constant 0 : i32
    %c0_i32_3 = arith.constant 0 : i32
    return %c0_i32, %c0_i32_0, %c0_i32_1, %c0_i32_2 : i32, i32, i32, i32
  }
  func.func @transform_1(%arg0: i32) -> (i32, i32, i32, i32) {
    %c0_i32 = arith.constant 0 : i32
    %c0_i32_0 = arith.constant 0 : i32
    %c0_i32_1 = arith.constant 0 : i32
    %c0_i32_2 = arith.constant 0 : i32
    %c0_i32_3 = arith.constant 0 : i32
    return %c0_i32, %c0_i32_0, %c0_i32_1, %c0_i32_2 : i32, i32, i32, i32
  }
}

module attributes {stable_mosaic.version = 11 : i64} {
  func.func @_c1_ds_kernel(%arg0: i32, %arg1: memref<32x16xbf16, #tpu.memory_space<vmem>>, %arg2: memref<16x8xbf16, #tpu.memory_space<vmem>>, %arg3: memref<1x8xf32, #tpu.memory_space<vmem>>, %arg4: memref<16x32xbf16, #tpu.memory_space<vmem>>, %arg5: memref<1x32xf32, #tpu.memory_space<vmem>>, %arg6: memref<32x8xbf16, #tpu.memory_space<vmem>>, %arg7: memref<32x32xf32, #tpu.memory_space<vmem>>) attributes {dimension_semantics = [#tpu.dimension_semantics<arbitrary>], iteration_bounds = array<i64: 1>, scalar_prefetch = 0 : i64, scratch_operands = 0 : i64, tpu.core_type = #tpu.core_type<tc>, window_params = [{pipeline_mode = #tpu.pipeline_mode<synchronous>, transform_indices = @transform_0, window_bounds = array<i64: 32, 16>}, {pipeline_mode = #tpu.pipeline_mode<synchronous>, transform_indices = @transform_1, window_bounds = array<i64: 16, 8>}, {pipeline_mode = #tpu.pipeline_mode<synchronous>, transform_indices = @transform_2, window_bounds = array<i64: 1, 8>}, {pipeline_mode = #tpu.pipeline_mode<synchronous>, transform_indices = @transform_3, window_bounds = array<i64: 16, 32>}, {pipeline_mode = #tpu.pipeline_mode<synchronous>, transform_indices = @transform_4, window_bounds = array<i64: 1, 32>}, {pipeline_mode = #tpu.pipeline_mode<synchronous>, transform_indices = @transform_5, window_bounds = array<i64: 32, 8>}, {pipeline_mode = #tpu.pipeline_mode<synchronous>, transform_indices = @transform_6, window_bounds = array<i64: 32, 32>}]} {
    %c0 = arith.constant 0 : index
    %c0_0 = arith.constant 0 : index
    %0 = vector.load %arg1[%c0, %c0_0] : memref<32x16xbf16, #tpu.memory_space<vmem>>, vector<32x16xbf16>
    %c0_1 = arith.constant 0 : index
    %c0_2 = arith.constant 0 : index
    %1 = vector.load %arg2[%c0_1, %c0_2] : memref<16x8xbf16, #tpu.memory_space<vmem>>, vector<16x8xbf16>
    %cst = arith.constant dense<0.000000e+00> : vector<32x8xf32>
    %2 = tpu.matmul %0, %1, %cst {dimension_numbers = #tpu.dot_dimension_numbers<[1], [0], [0], [1], [0, 0, 1, 1], [], []>} : vector<32x16xbf16>, vector<16x8xbf16>, vector<32x8xf32> -> vector<32x8xf32>
    %c0_3 = arith.constant 0 : index
    %c0_4 = arith.constant 0 : index
    %3 = vector.load %arg3[%c0_3, %c0_4] : memref<1x8xf32, #tpu.memory_space<vmem>>, vector<1x8xf32>
    %4 = vector.broadcast %3 : vector<1x8xf32> to vector<32x8xf32>
    %5 = arith.addf %2, %4 : vector<32x8xf32>
    %cst_5 = arith.constant 0.000000e+00 : f32
    %6 = vector.broadcast %cst_5 : f32 to vector<32x8xf32>
    %7 = arith.maximumf %5, %6 : vector<32x8xf32>
    %8 = arith.truncf %7 : vector<32x8xf32> to vector<32x8xbf16>
    %c0_6 = arith.constant 0 : index
    %c0_7 = arith.constant 0 : index
    %9 = vector.load %arg6[%c0_6, %c0_7] : memref<32x8xbf16, #tpu.memory_space<vmem>>, vector<32x8xbf16>
    tpu.vector_store %arg6[%c0_6, %c0_7], %8 {strides = array<i32>} : memref<32x8xbf16, #tpu.memory_space<vmem>>, vector<32x8xbf16>,
    %c0_8 = arith.constant 0 : index
    %c0_9 = arith.constant 0 : index
    %10 = vector.load %arg4[%c0_8, %c0_9] : memref<16x32xbf16, #tpu.memory_space<vmem>>, vector<16x32xbf16>
    %cst_10 = arith.constant dense<0.000000e+00> : vector<32x32xf32>
    %11 = tpu.matmul %0, %10, %cst_10 {dimension_numbers = #tpu.dot_dimension_numbers<[1], [0], [0], [1], [0, 0, 1, 1], [], []>} : vector<32x16xbf16>, vector<16x32xbf16>, vector<32x32xf32> -> vector<32x32xf32>
    %c0_11 = arith.constant 0 : index
    %c0_12 = arith.constant 0 : index
    %12 = vector.load %arg5[%c0_11, %c0_12] : memref<1x32xf32, #tpu.memory_space<vmem>>, vector<1x32xf32>
    %13 = vector.broadcast %12 : vector<1x32xf32> to vector<32x32xf32>
    %14 = arith.addf %11, %13 : vector<32x32xf32>
    %c0_13 = arith.constant 0 : index
    %c0_14 = arith.constant 0 : index
    %15 = vector.load %arg7[%c0_13, %c0_14] : memref<32x32xf32, #tpu.memory_space<vmem>>, vector<32x32xf32>
    tpu.vector_store %arg7[%c0_13, %c0_14], %14 {strides = array<i32>} : memref<32x32xf32, #tpu.memory_space<vmem>>, vector<32x32xf32>,
    return
  }
  func.func @transform_0(%arg0: i32) -> (i32, i32) {
    %c0_i32 = arith.constant 0 : i32
    %c0_i32_0 = arith.constant 0 : i32
    %c0_i32_1 = arith.constant 0 : i32
    return %c0_i32, %c0_i32_0 : i32, i32
  }
  func.func @transform_1(%arg0: i32) -> (i32, i32) {
    %c0_i32 = arith.constant 0 : i32
    %c0_i32_0 = arith.constant 0 : i32
    %c0_i32_1 = arith.constant 0 : i32
    return %c0_i32, %c0_i32_0 : i32, i32
  }
  func.func @transform_2(%arg0: i32) -> (i32, i32) {
    %c0_i32 = arith.constant 0 : i32
    %c0_i32_0 = arith.constant 0 : i32
    %c0_i32_1 = arith.constant 0 : i32
    return %c0_i32, %c0_i32_0 : i32, i32
  }
  func.func @transform_3(%arg0: i32) -> (i32, i32) {
    %c0_i32 = arith.constant 0 : i32
    %c0_i32_0 = arith.constant 0 : i32
    %c0_i32_1 = arith.constant 0 : i32
    return %c0_i32, %c0_i32_0 : i32, i32
  }
  func.func @transform_4(%arg0: i32) -> (i32, i32) {
    %c0_i32 = arith.constant 0 : i32
    %c0_i32_0 = arith.constant 0 : i32
    %c0_i32_1 = arith.constant 0 : i32
    return %c0_i32, %c0_i32_0 : i32, i32
  }
  func.func @transform_5(%arg0: i32) -> (i32, i32) {
    %c0_i32 = arith.constant 0 : i32
    %c0_i32_0 = arith.constant 0 : i32
    %c0_i32_1 = arith.constant 0 : i32
    return %c0_i32, %c0_i32_0 : i32, i32
  }
  func.func @transform_6(%arg0: i32) -> (i32, i32) {
    %c0_i32 = arith.constant 0 : i32
    %c0_i32_0 = arith.constant 0 : i32
    %c0_i32_1 = arith.constant 0 : i32
    return %c0_i32, %c0_i32_0 : i32, i32
  }
}

module attributes {stable_mosaic.version = 11 : i64} {
  func.func @_bottleneck_tail_kernel(%arg0: i32, %arg1: memref<32x72xbf16, #tpu.memory_space<vmem>>, %arg2: memref<72x8xbf16, #tpu.memory_space<vmem>>, %arg3: memref<1x8xf32, #tpu.memory_space<vmem>>, %arg4: memref<8x32xbf16, #tpu.memory_space<vmem>>, %arg5: memref<1x32xf32, #tpu.memory_space<vmem>>, %arg6: memref<32x32xf32, #tpu.memory_space<vmem>>, %arg7: memref<2x32xf32, #tpu.memory_space<vmem>>, %arg8: memref<2x32xf32, #tpu.memory_space<vmem>>) attributes {dimension_semantics = [#tpu.dimension_semantics<arbitrary>], iteration_bounds = array<i64: 1>, scalar_prefetch = 0 : i64, scratch_operands = 0 : i64, tpu.core_type = #tpu.core_type<tc>, window_params = [{pipeline_mode = #tpu.pipeline_mode<synchronous>, transform_indices = @transform_0, window_bounds = array<i64: 32, 72>}, {pipeline_mode = #tpu.pipeline_mode<synchronous>, transform_indices = @transform_1, window_bounds = array<i64: 72, 8>}, {pipeline_mode = #tpu.pipeline_mode<synchronous>, transform_indices = @transform_2, window_bounds = array<i64: 1, 8>}, {pipeline_mode = #tpu.pipeline_mode<synchronous>, transform_indices = @transform_3, window_bounds = array<i64: 8, 32>}, {pipeline_mode = #tpu.pipeline_mode<synchronous>, transform_indices = @transform_4, window_bounds = array<i64: 1, 32>}, {pipeline_mode = #tpu.pipeline_mode<synchronous>, transform_indices = @transform_5, window_bounds = array<i64: 32, 32>}, {pipeline_mode = #tpu.pipeline_mode<synchronous>, transform_indices = @transform_6, window_bounds = array<i64: 2, 32>}, {pipeline_mode = #tpu.pipeline_mode<synchronous>, transform_indices = @transform_7, window_bounds = array<i64: 2, 32>}]} {
    %c0 = arith.constant 0 : index
    %c0_0 = arith.constant 0 : index
    %0 = vector.load %arg1[%c0, %c0_0] : memref<32x72xbf16, #tpu.memory_space<vmem>>, vector<32x72xbf16>
    %c0_1 = arith.constant 0 : index
    %c0_2 = arith.constant 0 : index
    %1 = vector.load %arg2[%c0_1, %c0_2] : memref<72x8xbf16, #tpu.memory_space<vmem>>, vector<72x8xbf16>
    %cst = arith.constant dense<0.000000e+00> : vector<32x8xf32>
    %2 = tpu.matmul %0, %1, %cst {dimension_numbers = #tpu.dot_dimension_numbers<[1], [0], [0], [1], [0, 0, 1, 1], [], []>} : vector<32x72xbf16>, vector<72x8xbf16>, vector<32x8xf32> -> vector<32x8xf32>
    %c0_3 = arith.constant 0 : index
    %c0_4 = arith.constant 0 : index
    %3 = vector.load %arg3[%c0_3, %c0_4] : memref<1x8xf32, #tpu.memory_space<vmem>>, vector<1x8xf32>
    %4 = vector.broadcast %3 : vector<1x8xf32> to vector<32x8xf32>
    %5 = arith.addf %2, %4 : vector<32x8xf32>
    %cst_5 = arith.constant 0.000000e+00 : f32
    %6 = vector.broadcast %cst_5 : f32 to vector<32x8xf32>
    %7 = arith.maximumf %5, %6 : vector<32x8xf32>
    %8 = arith.truncf %7 : vector<32x8xf32> to vector<32x8xbf16>
    %c0_6 = arith.constant 0 : index
    %c0_7 = arith.constant 0 : index
    %9 = vector.load %arg4[%c0_6, %c0_7] : memref<8x32xbf16, #tpu.memory_space<vmem>>, vector<8x32xbf16>
    %cst_8 = arith.constant dense<0.000000e+00> : vector<32x32xf32>
    %10 = tpu.matmul %8, %9, %cst_8 {dimension_numbers = #tpu.dot_dimension_numbers<[1], [0], [0], [1], [0, 0, 1, 1], [], []>} : vector<32x8xbf16>, vector<8x32xbf16>, vector<32x32xf32> -> vector<32x32xf32>
    %c0_9 = arith.constant 0 : index
    %c0_10 = arith.constant 0 : index
    %11 = vector.load %arg5[%c0_9, %c0_10] : memref<1x32xf32, #tpu.memory_space<vmem>>, vector<1x32xf32>
    %12 = vector.broadcast %11 : vector<1x32xf32> to vector<32x32xf32>
    %13 = arith.addf %10, %12 : vector<32x32xf32>
    %c0_11 = arith.constant 0 : index
    %c0_12 = arith.constant 0 : index
    %14 = vector.load %arg6[%c0_11, %c0_12] : memref<32x32xf32, #tpu.memory_space<vmem>>, vector<32x32xf32>
    %15 = arith.addf %13, %14 : vector<32x32xf32>
    %cst_13 = arith.constant 0.000000e+00 : f32
    %16 = vector.broadcast %cst_13 : f32 to vector<32x32xf32>
    %17 = arith.maximumf %15, %16 : vector<32x32xf32>
    %c0_14 = arith.constant 0 : index
    %c0_15 = arith.constant 0 : index
    %18 = vector.load %arg7[%c0_14, %c0_15] : memref<2x32xf32, #tpu.memory_space<vmem>>, vector<2x32xf32>
    %cst_16 = arith.constant dense<0.000000e+00> : vector<2x32xf32>
    %19 = tpu.matmul %18, %17, %cst_16 {dimension_numbers = #tpu.dot_dimension_numbers<[1], [0], [0], [1], [0, 0, 1, 1], [], []>} : vector<2x32xf32>, vector<32x32xf32>, vector<2x32xf32> -> vector<2x32xf32>
    %c0_17 = arith.constant 0 : index
    %c0_18 = arith.constant 0 : index
    %20 = vector.load %arg8[%c0_17, %c0_18] : memref<2x32xf32, #tpu.memory_space<vmem>>, vector<2x32xf32>
    tpu.vector_store %arg8[%c0_17, %c0_18], %19 {strides = array<i32>} : memref<2x32xf32, #tpu.memory_space<vmem>>, vector<2x32xf32>,
    return
  }
  func.func @transform_0(%arg0: i32) -> (i32, i32) {
    %c0_i32 = arith.constant 0 : i32
    %c0_i32_0 = arith.constant 0 : i32
    %c0_i32_1 = arith.constant 0 : i32
    return %c0_i32, %c0_i32_0 : i32, i32
  }
  func.func @transform_1(%arg0: i32) -> (i32, i32) {
    %c0_i32 = arith.constant 0 : i32
    %c0_i32_0 = arith.constant 0 : i32
    %c0_i32_1 = arith.constant 0 : i32
    return %c0_i32, %c0_i32_0 : i32, i32
  }
  func.func @transform_2(%arg0: i32) -> (i32, i32) {
    %c0_i32 = arith.constant 0 : i32
    %c0_i32_0 = arith.constant 0 : i32
    %c0_i32_1 = arith.constant 0 : i32
    return %c0_i32, %c0_i32_0 : i32, i32
  }
  func.func @transform_3(%arg0: i32) -> (i32, i32) {
    %c0_i32 = arith.constant 0 : i32
    %c0_i32_0 = arith.constant 0 : i32
    %c0_i32_1 = arith.constant 0 : i32
    return %c0_i32, %c0_i32_0 : i32, i32
  }
  func.func @transform_4(%arg0: i32) -> (i32, i32) {
    %c0_i32 = arith.constant 0 : i32
    %c0_i32_0 = arith.constant 0 : i32
    %c0_i32_1 = arith.constant 0 : i32
    return %c0_i32, %c0_i32_0 : i32, i32
  }
  func.func @transform_5(%arg0: i32) -> (i32, i32) {
    %c0_i32 = arith.constant 0 : i32
    %c0_i32_0 = arith.constant 0 : i32
    %c0_i32_1 = arith.constant 0 : i32
    return %c0_i32, %c0_i32_0 : i32, i32
  }
  func.func @transform_6(%arg0: i32) -> (i32, i32) {
    %c0_i32 = arith.constant 0 : i32
    %c0_i32_0 = arith.constant 0 : i32
    %c0_i32_1 = arith.constant 0 : i32
    return %c0_i32, %c0_i32_0 : i32, i32
  }
  func.func @transform_7(%arg0: i32) -> (i32, i32) {
    %c0_i32 = arith.constant 0 : i32
    %c0_i32_0 = arith.constant 0 : i32
    %c0_i32_1 = arith.constant 0 : i32
    return %c0_i32, %c0_i32_0 : i32, i32
  }
}

module attributes {stable_mosaic.version = 11 : i64} {
  func.func @_fc_head_kernel(%arg0: i32, %arg1: memref<2x32xbf16, #tpu.memory_space<vmem>>, %arg2: memref<32x64xbf16, #tpu.memory_space<vmem>>, %arg3: memref<1x64xf32, #tpu.memory_space<vmem>>, %arg4: memref<64x64xbf16, #tpu.memory_space<vmem>>, %arg5: memref<1x64xf32, #tpu.memory_space<vmem>>, %arg6: memref<64x2xbf16, #tpu.memory_space<vmem>>, %arg7: memref<1x2xf32, #tpu.memory_space<vmem>>, %arg8: memref<2x2xf32, #tpu.memory_space<vmem>>) attributes {dimension_semantics = [#tpu.dimension_semantics<arbitrary>], iteration_bounds = array<i64: 1>, scalar_prefetch = 0 : i64, scratch_operands = 0 : i64, tpu.core_type = #tpu.core_type<tc>, window_params = [{pipeline_mode = #tpu.pipeline_mode<synchronous>, transform_indices = @transform_0, window_bounds = array<i64: 2, 32>}, {pipeline_mode = #tpu.pipeline_mode<synchronous>, transform_indices = @transform_1, window_bounds = array<i64: 32, 64>}, {pipeline_mode = #tpu.pipeline_mode<synchronous>, transform_indices = @transform_2, window_bounds = array<i64: 1, 64>}, {pipeline_mode = #tpu.pipeline_mode<synchronous>, transform_indices = @transform_3, window_bounds = array<i64: 64, 64>}, {pipeline_mode = #tpu.pipeline_mode<synchronous>, transform_indices = @transform_4, window_bounds = array<i64: 1, 64>}, {pipeline_mode = #tpu.pipeline_mode<synchronous>, transform_indices = @transform_5, window_bounds = array<i64: 64, 2>}, {pipeline_mode = #tpu.pipeline_mode<synchronous>, transform_indices = @transform_6, window_bounds = array<i64: 1, 2>}, {pipeline_mode = #tpu.pipeline_mode<synchronous>, transform_indices = @transform_7, window_bounds = array<i64: 2, 2>}]} {
    %c0 = arith.constant 0 : index
    %c0_0 = arith.constant 0 : index
    %0 = vector.load %arg1[%c0, %c0_0] : memref<2x32xbf16, #tpu.memory_space<vmem>>, vector<2x32xbf16>
    %c0_1 = arith.constant 0 : index
    %c0_2 = arith.constant 0 : index
    %1 = vector.load %arg2[%c0_1, %c0_2] : memref<32x64xbf16, #tpu.memory_space<vmem>>, vector<32x64xbf16>
    %cst = arith.constant dense<0.000000e+00> : vector<2x64xf32>
    %2 = tpu.matmul %0, %1, %cst {dimension_numbers = #tpu.dot_dimension_numbers<[1], [0], [0], [1], [0, 0, 1, 1], [], []>} : vector<2x32xbf16>, vector<32x64xbf16>, vector<2x64xf32> -> vector<2x64xf32>
    %c0_3 = arith.constant 0 : index
    %c0_4 = arith.constant 0 : index
    %3 = vector.load %arg3[%c0_3, %c0_4] : memref<1x64xf32, #tpu.memory_space<vmem>>, vector<1x64xf32>
    %4 = vector.broadcast %3 : vector<1x64xf32> to vector<2x64xf32>
    %5 = arith.addf %2, %4 : vector<2x64xf32>
    %cst_5 = arith.constant 0.00999999977 : f32
    %6 = vector.broadcast %cst_5 : f32 to vector<2x64xf32>
    %7 = arith.mulf %6, %5 : vector<2x64xf32>
    %8 = arith.maximumf %5, %7 : vector<2x64xf32>
    %9 = arith.truncf %8 : vector<2x64xf32> to vector<2x64xbf16>
    %c0_6 = arith.constant 0 : index
    %c0_7 = arith.constant 0 : index
    %10 = vector.load %arg4[%c0_6, %c0_7] : memref<64x64xbf16, #tpu.memory_space<vmem>>, vector<64x64xbf16>
    %cst_8 = arith.constant dense<0.000000e+00> : vector<2x64xf32>
    %11 = tpu.matmul %9, %10, %cst_8 {dimension_numbers = #tpu.dot_dimension_numbers<[1], [0], [0], [1], [0, 0, 1, 1], [], []>} : vector<2x64xbf16>, vector<64x64xbf16>, vector<2x64xf32> -> vector<2x64xf32>
    %c0_9 = arith.constant 0 : index
    %c0_10 = arith.constant 0 : index
    %12 = vector.load %arg5[%c0_9, %c0_10] : memref<1x64xf32, #tpu.memory_space<vmem>>, vector<1x64xf32>
    %13 = vector.broadcast %12 : vector<1x64xf32> to vector<2x64xf32>
    %14 = arith.addf %11, %13 : vector<2x64xf32>
    %cst_11 = arith.constant 0.00999999977 : f32
    %15 = vector.broadcast %cst_11 : f32 to vector<2x64xf32>
    %16 = arith.mulf %15, %14 : vector<2x64xf32>
    %17 = arith.maximumf %14, %16 : vector<2x64xf32>
    %18 = arith.truncf %17 : vector<2x64xf32> to vector<2x64xbf16>
    %c0_12 = arith.constant 0 : index
    %c0_13 = arith.constant 0 : index
    %19 = vector.load %arg6[%c0_12, %c0_13] : memref<64x2xbf16, #tpu.memory_space<vmem>>, vector<64x2xbf16>
    %cst_14 = arith.constant dense<0.000000e+00> : vector<2x2xf32>
    %20 = tpu.matmul %18, %19, %cst_14 {dimension_numbers = #tpu.dot_dimension_numbers<[1], [0], [0], [1], [0, 0, 1, 1], [], []>} : vector<2x64xbf16>, vector<64x2xbf16>, vector<2x2xf32> -> vector<2x2xf32>
    %c0_15 = arith.constant 0 : index
    %c0_16 = arith.constant 0 : index
    %21 = vector.load %arg7[%c0_15, %c0_16] : memref<1x2xf32, #tpu.memory_space<vmem>>, vector<1x2xf32>
    %22 = vector.broadcast %21 : vector<1x2xf32> to vector<2x2xf32>
    %23 = arith.addf %20, %22 : vector<2x2xf32>
    %c0_17 = arith.constant 0 : index
    %c0_18 = arith.constant 0 : index
    %24 = vector.load %arg8[%c0_17, %c0_18] : memref<2x2xf32, #tpu.memory_space<vmem>>, vector<2x2xf32>
    tpu.vector_store %arg8[%c0_17, %c0_18], %23 {strides = array<i32>} : memref<2x2xf32, #tpu.memory_space<vmem>>, vector<2x2xf32>,
    return
  }
  func.func @transform_0(%arg0: i32) -> (i32, i32) {
    %c0_i32 = arith.constant 0 : i32
    %c0_i32_0 = arith.constant 0 : i32
    %c0_i32_1 = arith.constant 0 : i32
    return %c0_i32, %c0_i32_0 : i32, i32
  }
  func.func @transform_1(%arg0: i32) -> (i32, i32) {
    %c0_i32 = arith.constant 0 : i32
    %c0_i32_0 = arith.constant 0 : i32
    %c0_i32_1 = arith.constant 0 : i32
    return %c0_i32, %c0_i32_0 : i32, i32
  }
  func.func @transform_2(%arg0: i32) -> (i32, i32) {
    %c0_i32 = arith.constant 0 : i32
    %c0_i32_0 = arith.constant 0 : i32
    %c0_i32_1 = arith.constant 0 : i32
    return %c0_i32, %c0_i32_0 : i32, i32
  }
  func.func @transform_3(%arg0: i32) -> (i32, i32) {
    %c0_i32 = arith.constant 0 : i32
    %c0_i32_0 = arith.constant 0 : i32
    %c0_i32_1 = arith.constant 0 : i32
    return %c0_i32, %c0_i32_0 : i32, i32
  }
  func.func @transform_4(%arg0: i32) -> (i32, i32) {
    %c0_i32 = arith.constant 0 : i32
    %c0_i32_0 = arith.constant 0 : i32
    %c0_i32_1 = arith.constant 0 : i32
    return %c0_i32, %c0_i32_0 : i32, i32
  }
  func.func @transform_5(%arg0: i32) -> (i32, i32) {
    %c0_i32 = arith.constant 0 : i32
    %c0_i32_0 = arith.constant 0 : i32
    %c0_i32_1 = arith.constant 0 : i32
    return %c0_i32, %c0_i32_0 : i32, i32
  }
  func.func @transform_6(%arg0: i32) -> (i32, i32) {
    %c0_i32 = arith.constant 0 : i32
    %c0_i32_0 = arith.constant 0 : i32
    %c0_i32_1 = arith.constant 0 : i32
    return %c0_i32, %c0_i32_0 : i32, i32
  }
  func.func @transform_7(%arg0: i32) -> (i32, i32) {
    %c0_i32 = arith.constant 0 : i32
    %c0_i32_0 = arith.constant 0 : i32
    %c0_i32_1 = arith.constant 0 : i32
    return %c0_i32, %c0_i32_0 : i32, i32
  }
}

</mosaic_0001>

<llo_original>
// kernel: resnet_attr_forward.5
$region0: #{resnet_attr_forward.5}
  #allocation0 [shape = 'u32[]', space=smem, size = 0x4, offset = 0x4, fixed_abs, tag = 'smem constant byte address 0x4 - core index']
  #allocation1 [shape = 'u32[144,128]{1,0:T(1,128)}', space=vmem, size = 0x12000, scoped, tag = 'internal scratch']
  %s0 = inlined_call_operand.vmem [shape: bf16[128,147], index: 0, kind: input, shape index: {}]
  %s1 = inlined_call_operand.vmem [shape: bf16[147,16], index: 1, kind: input, shape index: {}]
  %s2 = inlined_call_operand.vmem [shape: f32[1,16], index: 2, kind: input, shape index: {}]
  %s3 = inlined_call_operand.vmem [shape: f32[128,16], index: 3, kind: output, shape index: {}]
  %s4 = sld [smem:[#allocation0]]
  $region22: #{resnet_attr_forward.5} parent=0
    _
  %s6 = ssub.s32 1, %s4
  %s7 = scalar_select 0, %s6, %s4
  // Predicated region
  $region2: #{resnet_attr_forward.5} parent=0 // pred_check
    _
  $region3: #{resnet_attr_forward.5} parent=0 // pred_check_branch
    %9 = sbr.rel (0) target = $region5
  $region4: #{resnet_attr_forward.5} parent=0 // pred_region
    _
  $region5: #{resnet_attr_forward.5} parent=0 // pred_fallthru
    _
  // Predicated region
  $region6: #{resnet_attr_forward.5} parent=0 // pred_check
    _
  $region7: #{resnet_attr_forward.5} parent=0 // pred_check_branch
    %11 = sbr.rel (0) target = $region9
  $region8: #{resnet_attr_forward.5} parent=0 // pred_region
    _
  $region9: #{resnet_attr_forward.5} parent=0 // pred_fallthru
    _
  // Predicated region
  $region10: #{resnet_attr_forward.5} parent=0 // pred_check
    _
  $region11: #{resnet_attr_forward.5} parent=0 // pred_check_branch
    %13 = sbr.rel (0) target = $region13
  $region12: #{resnet_attr_forward.5} parent=0 // pred_region
    _
  $region13: #{resnet_attr_forward.5} parent=0 // pred_fallthru
    _
  %v15 = vld [vmem:[%s0] sm:$0xff]
  %v16 = vld [vmem:[%s0 + $0x8] sm:$0xff]
  %v17 = vld [vmem:[%s0 + $0x10] sm:$0xff]
  %v18 = vld [vmem:[%s0 + $0x18] sm:$0xff]
  %v19 = vld [vmem:[%s0 + $0x20] sm:$0xff]
  %v20 = vld [vmem:[%s0 + $0x28] sm:$0xff]
  %v21 = vld [vmem:[%s0 + $0x30] sm:$0xff]
  %v22 = vld [vmem:[%s0 + $0x38] sm:$0xff]
  %v23 = vld [vmem:[%s0 + $0x40] sm:$0xff]
  %v24 = vld [vmem:[%s0 + $0x48] sm:$0xff]
  %v25 = vld [vmem:[%s0 + $0x50] sm:$0xff]
  %v26 = vld [vmem:[%s0 + $0x58] sm:$0xff]
  %v27 = vld [vmem:[%s0 + $0x60] sm:$0xff]
  %v28 = vld [vmem:[%s0 + $0x68] sm:$0xff]
  %v29 = vld [vmem:[%s0 + $0x70] sm:$0xff]
  %v30 = vld [vmem:[%s0 + $0x78] sm:$0xff]
  %v31 = vld [vmem:[%s1] sm:$0xf]
  %v32 = vld [vmem:[%s1 + $0x4] sm:$0xf]
  %v33 = vld [vmem:[%s1 + $0x8] sm:$0xf]
  %v34 = vld [vmem:[%s1 + $0xc] sm:$0xf]
  %v35 = vld [vmem:[%s1 + $0x10] sm:$0xf]
  %v36 = vld [vmem:[%s1 + $0x14] sm:$0xf]
  %v37 = vld [vmem:[%s1 + $0x18] sm:$0xf]
  %v38 = vld [vmem:[%s1 + $0x1c] sm:$0xf]
  %v39 = vld [vmem:[%s1 + $0x20] sm:$0xf]
  %v40 = vld [vmem:[%s1 + $0x24] sm:$0xf]
  %v41 = vld [vmem:[%s1 + $0x28] sm:$0xf]
  %v42 = vld [vmem:[%s1 + $0x2c] sm:$0xf]
  %v43 = vld [vmem:[%s1 + $0x30] sm:$0xf]
  %v44 = vld [vmem:[%s1 + $0x34] sm:$0xf]
  %v45 = vld [vmem:[%s1 + $0x38] sm:$0xf]
  %v46 = vld [vmem:[%s1 + $0x3c] sm:$0xf]
  %v47 = vld [vmem:[%s1 + $0x40] sm:$0xf]
  %v48 = vld [vmem:[%s1 + $0x44] sm:$0xf]
  %v49 = vld [vmem:[%s1 + $0x48] sm:$0x3]
  %v50 = vld [vmem:[%s2] sm:$0x1]
  %v52 = vlaneseq
  %v53 = vshrl.u32 %v52, 7
  %v54 = vsub.s32 0, %v53
  %v55 = vrot.slane %v50, %v54
  %v73 = vunpack.c.l.b16 %v15
  %v74 = vunpack.c.h.b16 %v15
  %v75 = vunpack.c.l.b16 %v16
  %v76 = vunpack.c.h.b16 %v16
  %v77 = vunpack.c.l.b16 %v17
  %v78 = vunpack.c.h.b16 %v17
  %v79 = vunpack.c.l.b16 %v18
  %v80 = vunpack.c.h.b16 %v18
  %v81 = vunpack.c.l.b16 %v19
  %v82 = vunpack.c.h.b16 %v19
  %v83 = vunpack.c.l.b16 %v20
  %v84 = vunpack.c.h.b16 %v20
  %v85 = vunpack.c.l.b16 %v21
  %v86 = vunpack.c.h.b16 %v21
  %v87 = vunpack.c.l.b16 %v22
  %v88 = vunpack.c.h.b16 %v22
  %v89 = vunpack.c.l.b16 %v23
  %v90 = vunpack.c.h.b16 %v23
  %v91 = vunpack.c.l.b16 %v24
  %v92 = vunpack.c.h.b16 %v24
  %v93 = vunpack.c.l.b16 %v25
  %v94 = vunpack.c.h.b16 %v25
  %v95 = vunpack.c.l.b16 %v26
  %v96 = vunpack.c.h.b16 %v26
  %v97 = vunpack.c.l.b16 %v27
  %v98 = vunpack.c.h.b16 %v27
  %v99 = vunpack.c.l.b16 %v28
  %v100 = vunpack.c.h.b16 %v28
  %v101 = vunpack.c.l.b16 %v29
  %v102 = vunpack.c.h.b16 %v29
  %v103 = vunpack.c.l.b16 %v30
  %v104 = vunpack.c.h.b16 %v30
  %v105 = vpack.c.b16 %v75, %v73
  %v106 = vpack.c.b16 %v76, %v74
  %v107 = vpack.c.b16 %v79, %v77
  %v108 = vpack.c.b16 %v80, %v78
  %v109 = vpack.c.b16 %v83, %v81
  %v110 = vpack.c.b16 %v84, %v82
  %v111 = vpack.c.b16 %v87, %v85
  %v112 = vpack.c.b16 %v88, %v86
  %v113 = vpack.c.b16 %v91, %v89
  %v114 = vpack.c.b16 %v92, %v90
  %v115 = vpack.c.b16 %v95, %v93
  %v116 = vpack.c.b16 %v96, %v94
  %v117 = vpack.c.b16 %v99, %v97
  %v118 = vpack.c.b16 %v100, %v98
  %v119 = vpack.c.b16 %v103, %v101
  %v120 = vpack.c.b16 %v104, %v102
  %v148 = vunpack.c.l.b16 %v31
  %v149 = vunpack.c.l.b16 %v32
  %v150 = vunpack.c.l.b16 %v33
  %v151 = vunpack.c.l.b16 %v34
  %v152 = vunpack.c.l.b16 %v35
  %v153 = vunpack.c.l.b16 %v36
  %v154 = vunpack.c.l.b16 %v37
  %v155 = vunpack.c.l.b16 %v38
  %v156 = vunpack.c.l.b16 %v39
  %v157 = vunpack.c.l.b16 %v40
  %v158 = vunpack.c.l.b16 %v41
  %v159 = vunpack.c.l.b16 %v42
  %v160 = vunpack.c.l.b16 %v43
  %v161 = vunpack.c.l.b16 %v44
  %v162 = vunpack.c.l.b16 %v45
  %v163 = vunpack.c.l.b16 %v46
  %v164 = vunpack.c.l.b16 %v47
  %v165 = vunpack.c.l.b16 %v48
  %v166 = vunpack.c.l.b16 %v49
  %v167 = vpack.c.b16 %v149, %v148
  %v168 = vpack.c.b16 %v151, %v150
  %v169 = vpack.c.b16 %v153, %v152
  %v170 = vpack.c.b16 %v155, %v154
  %v171 = vpack.c.b16 %v157, %v156
  %v172 = vpack.c.b16 %v159, %v158
  %v173 = vpack.c.b16 %v161, %v160
  %v174 = vpack.c.b16 %v163, %v162
  %v175 = vpack.c.b16 %v165, %v164
  %v176 = vpack.c.b16 %v166, %v166
  %vm186 = vcmask 154624
  %v188 = vsel %vm186, %v106, 0
  %v191 = vsel %vm186, %v108, 0
  %v194 = vsel %vm186, %v110, 0
  %v197 = vsel %vm186, %v112, 0
  %v200 = vsel %vm186, %v114, 0
  %v203 = vsel %vm186, %v116, 0
  %v206 = vsel %vm186, %v118, 0
  %v209 = vsel %vm186, %v120, 0
  %vm211 = vcmask 1040384
  %vm212 = vcmask 1041408
  %v213 = vsel %vm211, 4294967295, 65535
  %v214 = vsel %vm212, %v213, 0
  %v216 = vand.u32 %v176, %v214
  %218 = vmatprep.subr.bf16.mxu0 0
  %219 = vmatpush1.bf16.msra.mxu0 %v174
  %220 = vmatprep.subr.bf16.mxu0 0
  %221 = vmatpush1.bf16.msra.mxu0 %v173
  %222 = vmatprep.subr.bf16.mxu0 0
  %223 = vmatpush1.bf16.msra.mxu0 %v172
  %224 = vmatprep.subr.bf16.mxu0 0
  %225 = vmatpush1.bf16.msra.mxu0 %v171
  %226 = vmatprep.subr.bf16.mxu0 0
  %227 = vmatpush1.bf16.msra.mxu0 %v170
  %228 = vmatprep.subr.bf16.mxu0 0
  %229 = vmatpush1.bf16.msra.mxu0 %v169
  %230 = vmatprep.subr.bf16.mxu0 0
  %231 = vmatpush1.bf16.msra.mxu0 %v168
  %232 = vmatprep.subr.bf16.mxu0 0
  %233 = vmatpush1.bf16.msra.mxu0 %v167
  %234 = vmatprep.subr.bf16.mxu0 0
  %235 = vmatpush2.bf16.msra.mxu0 0
  %236 = vmatprep.subr.bf16.mxu0 0
  %237 = vmatpush2.bf16.msra.mxu0 0
  %238 = vmatprep.subr.bf16.mxu0 0
  %239 = vmatpush2.bf16.msra.mxu0 0
  %240 = vmatprep.subr.bf16.mxu0 0
  %241 = vmatpush2.bf16.msra.mxu0 0
  %242 = vmatprep.subr.bf16.mxu0 0
  %243 = vmatpush2.bf16.msra.mxu0 0
  %244 = vmatprep.subr.bf16.mxu0 0
  %245 = vmatpush2.bf16.msra.mxu0 0
  %246 = vmatprep.subr.bf16.mxu0 0
  %247 = vmatpush2.bf16.msra.mxu0 %v216
  %248 = vmatprep.subr.bf16.mxu0 0
  %249 = vmatpush2.bf16.msra.mxu0 %v175
  %250 = vmatprep.mubr.bf16.mxu0 %v188
  %251 = vmatmul.mubr.bf16.gmra.mxu0 %v105
  %v252 = vpop.f32.mrf.mxu0
  %v253 = vadd.f32 %v55, %v252
  %v254 = vpop.f32.mrf.mxu0
  %v255 = vpop.f32.mrf.mxu0
  %v256 = vadd.f32 %v55, %v255
  %v257 = vpop.f32.mrf.mxu0
  %258 = vmatprep.mubr.bf16.mxu0 %v191
  %259 = vmatmul.mubr.bf16.gmra.mxu0 %v107
  %v260 = vpop.f32.mrf.mxu0
  %v261 = vadd.f32 %v55, %v260
  %v262 = vpop.f32.mrf.mxu0
  %v263 = vpop.f32.mrf.mxu0
  %v264 = vadd.f32 %v55, %v263
  %v265 = vpop.f32.mrf.mxu0
  %266 = vmatprep.mubr.bf16.mxu0 %v194
  %267 = vmatmul.mubr.bf16.gmra.mxu0 %v109
  %v268 = vpop.f32.mrf.mxu0
  %v269 = vadd.f32 %v55, %v268
  %v270 = vpop.f32.mrf.mxu0
  %v271 = vpop.f32.mrf.mxu0
  %v272 = vadd.f32 %v55, %v271
  %v273 = vpop.f32.mrf.mxu0
  %274 = vmatprep.mubr.bf16.mxu0 %v197
  %275 = vmatmul.mubr.bf16.gmra.mxu0 %v111
  %v276 = vpop.f32.mrf.mxu0
  %v277 = vadd.f32 %v55, %v276
  %v278 = vpop.f32.mrf.mxu0
  %v279 = vpop.f32.mrf.mxu0
  %v280 = vadd.f32 %v55, %v279
  %v281 = vpop.f32.mrf.mxu0
  %282 = vmatprep.mubr.bf16.mxu0 %v200
  %283 = vmatmul.mubr.bf16.gmra.mxu0 %v113
  %v284 = vpop.f32.mrf.mxu0
  %v285 = vadd.f32 %v55, %v284
  %v286 = vpop.f32.mrf.mxu0
  %v287 = vpop.f32.mrf.mxu0
  %v288 = vadd.f32 %v55, %v287
  %v289 = vpop.f32.mrf.mxu0
  %290 = vmatprep.mubr.bf16.mxu0 %v203
  %291 = vmatmul.mubr.bf16.gmra.mxu0 %v115
  %v292 = vpop.f32.mrf.mxu0
  %v293 = vadd.f32 %v55, %v292
  %v294 = vpop.f32.mrf.mxu0
  %v295 = vpop.f32.mrf.mxu0
  %v296 = vadd.f32 %v55, %v295
  %v297 = vpop.f32.mrf.mxu0
  %298 = vmatprep.mubr.bf16.mxu0 %v206
  %299 = vmatmul.mubr.bf16.gmra.mxu0 %v117
  %v300 = vpop.f32.mrf.mxu0
  %v301 = vadd.f32 %v55, %v300
  %v302 = vpop.f32.mrf.mxu0
  %v303 = vpop.f32.mrf.mxu0
  %v304 = vadd.f32 %v55, %v303
  %v305 = vpop.f32.mrf.mxu0
  %306 = vmatprep.mubr.bf16.mxu0 %v209
  %307 = vmatmul.mubr.bf16.gmra.mxu0 %v119
  %v308 = vpop.f32.mrf.mxu0
  %v309 = vadd.f32 %v55, %v308
  %v310 = vpop.f32.mrf.mxu0
  %v311 = vpop.f32.mrf.mxu0
  %v312 = vadd.f32 %v55, %v311
  %v313 = vpop.f32.mrf.mxu0
  %314 = vdwg.mxu0
  %v315 = vmax.f32 %v253, 0.0
  %v316 = vmax.f32 %v256, 0.0
  %v317 = vmax.f32 %v261, 0.0
  %v318 = vmax.f32 %v264, 0.0
  %v319 = vmax.f32 %v269, 0.0
  %v320 = vmax.f32 %v272, 0.0
  %v321 = vmax.f32 %v277, 0.0
  %v322 = vmax.f32 %v280, 0.0
  %v323 = vmax.f32 %v285, 0.0
  %v324 = vmax.f32 %v288, 0.0
  %v325 = vmax.f32 %v293, 0.0
  %v326 = vmax.f32 %v296, 0.0
  %v327 = vmax.f32 %v301, 0.0
  %v328 = vmax.f32 %v304, 0.0
  %v329 = vmax.f32 %v309, 0.0
  %v330 = vmax.f32 %v312, 0.0
  %vm331 = vcmask 130048
  %332 = vst.msk [vmem:[%s3] sm:$0xff] %vm331, %v315
  %333 = vst.msk [vmem:[%s3 + $0x8] sm:$0xff] %vm331, %v316
  %334 = vst.msk [vmem:[%s3 + $0x10] sm:$0xff] %vm331, %v317
  %335 = vst.msk [vmem:[%s3 + $0x18] sm:$0xff] %vm331, %v318
  %336 = vst.msk [vmem:[%s3 + $0x20] sm:$0xff] %vm331, %v319
  %337 = vst.msk [vmem:[%s3 + $0x28] sm:$0xff] %vm331, %v320
  %338 = vst.msk [vmem:[%s3 + $0x30] sm:$0xff] %vm331, %v321
  %339 = vst.msk [vmem:[%s3 + $0x38] sm:$0xff] %vm331, %v322
  %340 = vst.msk [vmem:[%s3 + $0x40] sm:$0xff] %vm331, %v323
  %341 = vst.msk [vmem:[%s3 + $0x48] sm:$0xff] %vm331, %v324
  %342 = vst.msk [vmem:[%s3 + $0x50] sm:$0xff] %vm331, %v325
  %343 = vst.msk [vmem:[%s3 + $0x58] sm:$0xff] %vm331, %v326
  %344 = vst.msk [vmem:[%s3 + $0x60] sm:$0xff] %vm331, %v327
  %345 = vst.msk [vmem:[%s3 + $0x68] sm:$0xff] %vm331, %v328
  %346 = vst.msk [vmem:[%s3 + $0x70] sm:$0xff] %vm331, %v329
  %347 = vst.msk [vmem:[%s3 + $0x78] sm:$0xff] %vm331, %v330
  // Predicated region
  $region14: #{resnet_attr_forward.5} parent=0 // pred_check
    _
  $region15: #{resnet_attr_forward.5} parent=0 // pred_check_branch
    %349 = sbr.rel (0) target = $region17
  $region16: #{resnet_attr_forward.5} parent=0 // pred_region
    _
  $region17: #{resnet_attr_forward.5} parent=0 // pred_fallthru
    _
  // Predicated region
  $region18: #{resnet_attr_forward.5} parent=0 // pred_check
    _
  $region19: #{resnet_attr_forward.5} parent=0 // pred_check_branch
    %351 = sbr.rel (0) target = $region21
  $region20: #{resnet_attr_forward.5} parent=0 // pred_region
    _
  $region21: #{resnet_attr_forward.5} parent=0 // pred_fallthru
    _

// kernel: resnet_attr_forward.6
$region0: #{resnet_attr_forward.6}
  #allocation0 [shape = 'u32[]', space=smem, size = 0x4, offset = 0x4, fixed_abs, tag = 'smem constant byte address 0x4 - core index']
  #allocation1 [shape = 'u32[144,128]{1,0:T(1,128)}', space=vmem, size = 0x12000, scoped, tag = 'internal scratch']
  %s0 = inlined_call_operand.vmem [shape: f32[2,10,10,16], index: 0, kind: input, shape index: {}]
  %s1 = inlined_call_operand.vmem [shape: f32[2,8,8,16], index: 1, kind: output, shape index: {}]
  %s2 = sld [smem:[#allocation0]]
  $region14: #{resnet_attr_forward.6} parent=0
    _
  %s4 = ssub.s32 1, %s2
  %s5 = scalar_select 0, %s4, %s2
  // Predicated region
  $region2: #{resnet_attr_forward.6} parent=0 // pred_check
    _
  $region3: #{resnet_attr_forward.6} parent=0 // pred_check_branch
    %7 = sbr.rel (0) target = $region5
  $region4: #{resnet_attr_forward.6} parent=0 // pred_region
    _
  $region5: #{resnet_attr_forward.6} parent=0 // pred_fallthru
    _
  %v8 = vld [vmem:[%s0] sm:$0xff]
  %v9 = vld [vmem:[%s0 + $0x8] sm:$0x3]
  %v10 = vld [vmem:[%s0 + $0x10] sm:$0xff]
  %v11 = vld [vmem:[%s0 + $0x18] sm:$0x3]
  %v12 = vld [vmem:[%s0 + $0x20] sm:$0xff]
  %v13 = vld [vmem:[%s0 + $0x28] sm:$0x3]
  %v14 = vld [vmem:[%s0 + $0x30] sm:$0xff]
  %v15 = vld [vmem:[%s0 + $0x38] sm:$0x3]
  %v16 = vld [vmem:[%s0 + $0x40] sm:$0xff]
  %v17 = vld [vmem:[%s0 + $0x48] sm:$0x3]
  %v18 = vld [vmem:[%s0 + $0x50] sm:$0xff]
  %v19 = vld [vmem:[%s0 + $0x58] sm:$0x3]
  %v20 = vld [vmem:[%s0 + $0x60] sm:$0xff]
  %v21 = vld [vmem:[%s0 + $0x68] sm:$0x3]
  %v22 = vld [vmem:[%s0 + $0x70] sm:$0xff]
  %v23 = vld [vmem:[%s0 + $0x78] sm:$0x3]
  %v24 = vld [vmem:[%s0 + $0x80] sm:$0xff]
  %v25 = vld [vmem:[%s0 + $0x88] sm:$0x3]
  %v26 = vld [vmem:[%s0 + $0x90] sm:$0xff]
  %v27 = vld [vmem:[%s0 + $0x98] sm:$0x3]
  %v28 = vld [vmem:[%s0 + $0xa0] sm:$0xff]
  %v29 = vld [vmem:[%s0 + $0xa8] sm:$0x3]
  %v30 = vld [vmem:[%s0 + $0xb0] sm:$0xff]
  %v31 = vld [vmem:[%s0 + $0xb8] sm:$0x3]
  %v32 = vld [vmem:[%s0 + $0xc0] sm:$0xff]
  %v33 = vld [vmem:[%s0 + $0xc8] sm:$0x3]
  %v34 = vld [vmem:[%s0 + $0xd0] sm:$0xff]
  %v35 = vld [vmem:[%s0 + $0xd8] sm:$0x3]
  %v36 = vld [vmem:[%s0 + $0xe0] sm:$0xff]
  %v37 = vld [vmem:[%s0 + $0xe8] sm:$0x3]
  %v38 = vld [vmem:[%s0 + $0xf0] sm:$0xff]
  %v39 = vld [vmem:[%s0 + $0xf8] sm:$0x3]
  %v40 = vld [vmem:[%s0 + $0x100] sm:$0xff]
  %v41 = vld [vmem:[%s0 + $0x108] sm:$0x3]
  %v42 = vld [vmem:[%s0 + $0x110] sm:$0xff]
  %v43 = vld [vmem:[%s0 + $0x118] sm:$0x3]
  %v44 = vld [vmem:[%s0 + $0x120] sm:$0xff]
  %v45 = vld [vmem:[%s0 + $0x128] sm:$0x3]
  %v46 = vld [vmem:[%s0 + $0x130] sm:$0xff]
  %v47 = vld [vmem:[%s0 + $0x138] sm:$0x3]
  %vm80 = vcmask 1046528
  %v81 = vrot.slane %v8, 1
  %v82 = vrot.slane %v9, 1
  %v83 = vsel %vm80, %v81, %v82
  %v84 = vrot.slane %v10, 1
  %v85 = vrot.slane %v11, 1
  %v86 = vsel %vm80, %v84, %v85
  %v87 = vrot.slane %v12, 1
  %v88 = vrot.slane %v13, 1
  %v89 = vsel %vm80, %v87, %v88
  %v90 = vrot.slane %v14, 1
  %v91 = vrot.slane %v15, 1
  %v92 = vsel %vm80, %v90, %v91
  %v93 = vrot.slane %v16, 1
  %v94 = vrot.slane %v17, 1
  %v95 = vsel %vm80, %v93, %v94
  %v96 = vrot.slane %v18, 1
  %v97 = vrot.slane %v19, 1
  %v98 = vsel %vm80, %v96, %v97
  %v99 = vrot.slane %v20, 1
  %v100 = vrot.slane %v21, 1
  %v101 = vsel %vm80, %v99, %v100
  %v102 = vrot.slane %v22, 1
  %v103 = vrot.slane %v23, 1
  %v104 = vsel %vm80, %v102, %v103
  %v105 = vrot.slane %v28, 1
  %v106 = vrot.slane %v29, 1
  %v107 = vsel %vm80, %v105, %v106
  %v108 = vrot.slane %v30, 1
  %v109 = vrot.slane %v31, 1
  %v110 = vsel %vm80, %v108, %v109
  %v111 = vrot.slane %v32, 1
  %v112 = vrot.slane %v33, 1
  %v113 = vsel %vm80, %v111, %v112
  %v114 = vrot.slane %v34, 1
  %v115 = vrot.slane %v35, 1
  %v116 = vsel %vm80, %v114, %v115
  %v117 = vrot.slane %v36, 1
  %v118 = vrot.slane %v37, 1
  %v119 = vsel %vm80, %v117, %v118
  %v120 = vrot.slane %v38, 1
  %v121 = vrot.slane %v39, 1
  %v122 = vsel %vm80, %v120, %v121
  %v123 = vrot.slane %v40, 1
  %v124 = vrot.slane %v41, 1
  %v125 = vsel %vm80, %v123, %v124
  %v126 = vrot.slane %v42, 1
  %v127 = vrot.slane %v43, 1
  %v128 = vsel %vm80, %v126, %v127
  %v145 = vmax.f32 %v8, %v83
  %v146 = vmax.f32 %v10, %v86
  %v147 = vmax.f32 %v12, %v89
  %v148 = vmax.f32 %v14, %v92
  %v149 = vmax.f32 %v16, %v95
  %v150 = vmax.f32 %v18, %v98
  %v151 = vmax.f32 %v20, %v101
  %v152 = vmax.f32 %v22, %v104
  %v153 = vmax.f32 %v28, %v107
  %v154 = vmax.f32 %v30, %v110
  %v155 = vmax.f32 %v32, %v113
  %v156 = vmax.f32 %v34, %v116
  %v157 = vmax.f32 %v36, %v119
  %v158 = vmax.f32 %v38, %v122
  %v159 = vmax.f32 %v40, %v125
  %v160 = vmax.f32 %v42, %v128
  %vm161 = vcmask 1045504
  %v162 = vrot.slane %v8, 2
  %v163 = vrot.slane %v9, 2
  %v164 = vsel %vm161, %v162, %v163
  %v165 = vrot.slane %v10, 2
  %v166 = vrot.slane %v11, 2
  %v167 = vsel %vm161, %v165, %v166
  %v168 = vrot.slane %v12, 2
  %v169 = vrot.slane %v13, 2
  %v170 = vsel %vm161, %v168, %v169
  %v171 = vrot.slane %v14, 2
  %v172 = vrot.slane %v15, 2
  %v173 = vsel %vm161, %v171, %v172
  %v174 = vrot.slane %v16, 2
  %v175 = vrot.slane %v17, 2
  %v176 = vsel %vm161, %v174, %v175
  %v177 = vrot.slane %v18, 2
  %v178 = vrot.slane %v19, 2
  %v179 = vsel %vm161, %v177, %v178
  %v180 = vrot.slane %v20, 2
  %v181 = vrot.slane %v21, 2
  %v182 = vsel %vm161, %v180, %v181
  %v183 = vrot.slane %v22, 2
  %v184 = vrot.slane %v23, 2
  %v185 = vsel %vm161, %v183, %v184
  %v186 = vrot.slane %v28, 2
  %v187 = vrot.slane %v29, 2
  %v188 = vsel %vm161, %v186, %v187
  %v189 = vrot.slane %v30, 2
  %v190 = vrot.slane %v31, 2
  %v191 = vsel %vm161, %v189, %v190
  %v192 = vrot.slane %v32, 2
  %v193 = vrot.slane %v33, 2
  %v194 = vsel %vm161, %v192, %v193
  %v195 = vrot.slane %v34, 2
  %v196 = vrot.slane %v35, 2
  %v197 = vsel %vm161, %v195, %v196
  %v198 = vrot.slane %v36, 2
  %v199 = vrot.slane %v37, 2
  %v200 = vsel %vm161, %v198, %v199
  %v201 = vrot.slane %v38, 2
  %v202 = vrot.slane %v39, 2
  %v203 = vsel %vm161, %v201, %v202
  %v204 = vrot.slane %v40, 2
  %v205 = vrot.slane %v41, 2
  %v206 = vsel %vm161, %v204, %v205
  %v207 = vrot.slane %v42, 2
  %v208 = vrot.slane %v43, 2
  %v209 = vsel %vm161, %v207, %v208
  %v226 = vmax.f32 %v145, %v164
  %v227 = vmax.f32 %v146, %v167
  %v228 = vmax.f32 %v147, %v170
  %v229 = vmax.f32 %v148, %v173
  %v230 = vmax.f32 %v149, %v176
  %v231 = vmax.f32 %v150, %v179
  %v232 = vmax.f32 %v151, %v182
  %v233 = vmax.f32 %v152, %v185
  %v234 = vmax.f32 %v153, %v188
  %v235 = vmax.f32 %v154, %v191
  %v236 = vmax.f32 %v155, %v194
  %v237 = vmax.f32 %v156, %v197
  %v238 = vmax.f32 %v157, %v200
  %v239 = vmax.f32 %v158, %v203
  %v240 = vmax.f32 %v159, %v206
  %v241 = vmax.f32 %v160, %v209
  %v242 = vmax.f32 %v226, %v10
  %v243 = vmax.f32 %v227, %v12
  %v244 = vmax.f32 %v228, %v14
  %v245 = vmax.f32 %v229, %v16
  %v246 = vmax.f32 %v230, %v18
  %v247 = vmax.f32 %v231, %v20
  %v248 = vmax.f32 %v232, %v22
  %v249 = vmax.f32 %v233, %v24
  %v250 = vmax.f32 %v234, %v30
  %v251 = vmax.f32 %v235, %v32
  %v252 = vmax.f32 %v236, %v34
  %v253 = vmax.f32 %v237, %v36
  %v254 = vmax.f32 %v238, %v38
  %v255 = vmax.f32 %v239, %v40
  %v256 = vmax.f32 %v240, %v42
  %v257 = vmax.f32 %v241, %v44
  %v262 = vrot.slane %v24, 1
  %v263 = vrot.slane %v25, 1
  %v264 = vsel %vm80, %v262, %v263
  %v265 = vrot.slane %v44, 1
  %v266 = vrot.slane %v45, 1
  %v267 = vsel %vm80, %v265, %v266
  %v270 = vmax.f32 %v242, %v86
  %v271 = vmax.f32 %v243, %v89
  %v272 = vmax.f32 %v244, %v92
  %v273 = vmax.f32 %v245, %v95
  %v274 = vmax.f32 %v246, %v98
  %v275 = vmax.f32 %v247, %v101
  %v276 = vmax.f32 %v248, %v104
  %v277 = vmax.f32 %v249, %v264
  %v278 = vmax.f32 %v250, %v110
  %v279 = vmax.f32 %v251, %v113
  %v280 = vmax.f32 %v252, %v116
  %v281 = vmax.f32 %v253, %v119
  %v282 = vmax.f32 %v254, %v122
  %v283 = vmax.f32 %v255, %v125
  %v284 = vmax.f32 %v256, %v128
  %v285 = vmax.f32 %v257, %v267
  %v286 = vrot.slane %v24, 2
  %v287 = vrot.slane %v25, 2
  %v288 = vsel %vm161, %v286, %v287
  %v289 = vrot.slane %v44, 2
  %v290 = vrot.slane %v45, 2
  %v291 = vsel %vm161, %v289, %v290
  %v294 = vmax.f32 %v270, %v167
  %v295 = vmax.f32 %v271, %v170
  %v296 = vmax.f32 %v272, %v173
  %v297 = vmax.f32 %v273, %v176
  %v298 = vmax.f32 %v274, %v179
  %v299 = vmax.f32 %v275, %v182
  %v300 = vmax.f32 %v276, %v185
  %v301 = vmax.f32 %v277, %v288
  %v302 = vmax.f32 %v278, %v191
  %v303 = vmax.f32 %v279, %v194
  %v304 = vmax.f32 %v280, %v197
  %v305 = vmax.f32 %v281, %v200
  %v306 = vmax.f32 %v282, %v203
  %v307 = vmax.f32 %v283, %v206
  %v308 = vmax.f32 %v284, %v209
  %v309 = vmax.f32 %v285, %v291
  %v310 = vmax.f32 %v294, %v12
  %v311 = vmax.f32 %v295, %v14
  %v312 = vmax.f32 %v296, %v16
  %v313 = vmax.f32 %v297, %v18
  %v314 = vmax.f32 %v298, %v20
  %v315 = vmax.f32 %v299, %v22
  %v316 = vmax.f32 %v300, %v24
  %v317 = vmax.f32 %v301, %v26
  %v318 = vmax.f32 %v302, %v32
  %v319 = vmax.f32 %v303, %v34
  %v320 = vmax.f32 %v304, %v36
  %v321 = vmax.f32 %v305, %v38
  %v322 = vmax.f32 %v306, %v40
  %v323 = vmax.f32 %v307, %v42
  %v324 = vmax.f32 %v308, %v44
  %v325 = vmax.f32 %v309, %v46
  %v330 = vrot.slane %v26, 1
  %v331 = vrot.slane %v27, 1
  %v332 = vsel %vm80, %v330, %v331
  %v333 = vrot.slane %v46, 1
  %v334 = vrot.slane %v47, 1
  %v335 = vsel %vm80, %v333, %v334
  %v338 = vmax.f32 %v310, %v89
  %v339 = vmax.f32 %v311, %v92
  %v340 = vmax.f32 %v312, %v95
  %v341 = vmax.f32 %v313, %v98
  %v342 = vmax.f32 %v314, %v101
  %v343 = vmax.f32 %v315, %v104
  %v344 = vmax.f32 %v316, %v264
  %v345 = vmax.f32 %v317, %v332
  %v346 = vmax.f32 %v318, %v113
  %v347 = vmax.f32 %v319, %v116
  %v348 = vmax.f32 %v320, %v119
  %v349 = vmax.f32 %v321, %v122
  %v350 = vmax.f32 %v322, %v125
  %v351 = vmax.f32 %v323, %v128
  %v352 = vmax.f32 %v324, %v267
  %v353 = vmax.f32 %v325, %v335
  %v354 = vrot.slane %v26, 2
  %v355 = vrot.slane %v27, 2
  %v356 = vsel %vm161, %v354, %v355
  %v357 = vrot.slane %v46, 2
  %v358 = vrot.slane %v47, 2
  %v359 = vsel %vm161, %v357, %v358
  %v362 = vmax.f32 %v338, %v170
  %v363 = vmax.f32 %v339, %v173
  %v364 = vmax.f32 %v340, %v176
  %v365 = vmax.f32 %v341, %v179
  %v366 = vmax.f32 %v342, %v182
  %v367 = vmax.f32 %v343, %v185
  %v368 = vmax.f32 %v344, %v288
  %v369 = vmax.f32 %v345, %v356
  %v370 = vmax.f32 %v346, %v194
  %v371 = vmax.f32 %v347, %v197
  %v372 = vmax.f32 %v348, %v200
  %v373 = vmax.f32 %v349, %v203
  %v374 = vmax.f32 %v350, %v206
  %v375 = vmax.f32 %v351, %v209
  %v376 = vmax.f32 %v352, %v291
  %v377 = vmax.f32 %v353, %v359
  %vm378 = vcmask 130048
  %379 = vst.msk [vmem:[%s1] sm:$0xff] %vm378, %v362
  %380 = vst.msk [vmem:[%s1 + $0x8] sm:$0xff] %vm378, %v363
  %381 = vst.msk [vmem:[%s1 + $0x10] sm:$0xff] %vm378, %v364
  %382 = vst.msk [vmem:[%s1 + $0x18] sm:$0xff] %vm378, %v365
  %383 = vst.msk [vmem:[%s1 + $0x20] sm:$0xff] %vm378, %v366
  %384 = vst.msk [vmem:[%s1 + $0x28] sm:$0xff] %vm378, %v367
  %385 = vst.msk [vmem:[%s1 + $0x30] sm:$0xff] %vm378, %v368
  %386 = vst.msk [vmem:[%s1 + $0x38] sm:$0xff] %vm378, %v369
  %387 = vst.msk [vmem:[%s1 + $0x40] sm:$0xff] %vm378, %v370
  %388 = vst.msk [vmem:[%s1 + $0x48] sm:$0xff] %vm378, %v371
  %389 = vst.msk [vmem:[%s1 + $0x50] sm:$0xff] %vm378, %v372
  %390 = vst.msk [vmem:[%s1 + $0x58] sm:$0xff] %vm378, %v373
  %391 = vst.msk [vmem:[%s1 + $0x60] sm:$0xff] %vm378, %v374
  %392 = vst.msk [vmem:[%s1 + $0x68] sm:$0xff] %vm378, %v375
  %393 = vst.msk [vmem:[%s1 + $0x70] sm:$0xff] %vm378, %v376
  %394 = vst.msk [vmem:[%s1 + $0x78] sm:$0xff] %vm378, %v377
  // Predicated region
  $region6: #{resnet_attr_forward.6} parent=0 // pred_check
    _
  $region7: #{resnet_attr_forward.6} parent=0 // pred_check_branch
    %396 = sbr.rel (0) target = $region9
  $region8: #{resnet_attr_forward.6} parent=0 // pred_region
    _
  $region9: #{resnet_attr_forward.6} parent=0 // pred_fallthru
    _
  // Predicated region
  $region10: #{resnet_attr_forward.6} parent=0 // pred_check
    _
  $region11: #{resnet_attr_forward.6} parent=0 // pred_check_branch
    %398 = sbr.rel (0) target = $region13
  $region12: #{resnet_attr_forward.6} parent=0 // pred_region
    _
  $region13: #{resnet_attr_forward.6} parent=0 // pred_fallthru
    _

// kernel: resnet_attr_forward.7
$region0: #{resnet_attr_forward.7}
  #allocation0 [shape = 'u32[]', space=smem, size = 0x4, offset = 0x4, fixed_abs, tag = 'smem constant byte address 0x4 - core index']
  #allocation1 [shape = 'u32[144,128]{1,0:T(1,128)}', space=vmem, size = 0x12000, scoped, tag = 'internal scratch']
  %s0 = inlined_call_operand.vmem [shape: bf16[32,16], index: 0, kind: input, shape index: {}]
  %s1 = inlined_call_operand.vmem [shape: bf16[16,8], index: 1, kind: input, shape index: {}]
  %s2 = inlined_call_operand.vmem [shape: f32[1,8], index: 2, kind: input, shape index: {}]
  %s3 = inlined_call_operand.vmem [shape: bf16[16,32], index: 3, kind: input, shape index: {}]
  %s4 = inlined_call_operand.vmem [shape: f32[1,32], index: 4, kind: input, shape index: {}]
  %s5 = inlined_call_operand.vmem [shape: bf16[32,8], index: 5, kind: output, shape index: {0}]
  %s6 = inlined_call_operand.vmem [shape: f32[32,32], index: 6, kind: output, shape index: {1}]
  %7 = xla_tuple %s5, %s6
  %s8 = sld [smem:[#allocation0]]
  $region38: #{resnet_attr_forward.7} parent=0
    _
  %s10 = ssub.s32 1, %s8
  %s11 = scalar_select 0, %s10, %s8
  // Predicated region
  $region2: #{resnet_attr_forward.7} parent=0 // pred_check
    _
  $region3: #{resnet_attr_forward.7} parent=0 // pred_check_branch
    %13 = sbr.rel (0) target = $region5
  $region4: #{resnet_attr_forward.7} parent=0 // pred_region
    _
  $region5: #{resnet_attr_forward.7} parent=0 // pred_fallthru
    _
  // Predicated region
  $region6: #{resnet_attr_forward.7} parent=0 // pred_check
    _
  $region7: #{resnet_attr_forward.7} parent=0 // pred_check_branch
    %15 = sbr.rel (0) target = $region9
  $region8: #{resnet_attr_forward.7} parent=0 // pred_region
    _
  $region9: #{resnet_attr_forward.7} parent=0 // pred_fallthru
    _
  // Predicated region
  $region10: #{resnet_attr_forward.7} parent=0 // pred_check
    _
  $region11: #{resnet_attr_forward.7} parent=0 // pred_check_branch
    %17 = sbr.rel (0) target = $region13
  $region12: #{resnet_attr_forward.7} parent=0 // pred_region
    _
  $region13: #{resnet_attr_forward.7} parent=0 // pred_fallthru
    _
  // Predicated region
  $region14: #{resnet_attr_forward.7} parent=0 // pred_check
    _
  $region15: #{resnet_attr_forward.7} parent=0 // pred_check_branch
    %19 = sbr.rel (0) target = $region17
  $region16: #{resnet_attr_forward.7} parent=0 // pred_region
    _
  $region17: #{resnet_attr_forward.7} parent=0 // pred_fallthru
    _
  // Predicated region
  $region18: #{resnet_attr_forward.7} parent=0 // pred_check
    _
  $region19: #{resnet_attr_forward.7} parent=0 // pred_check_branch
    %21 = sbr.rel (0) target = $region21
  $region20: #{resnet_attr_forward.7} parent=0 // pred_region
    _
  $region21: #{resnet_attr_forward.7} parent=0 // pred_fallthru
    _
  %v23 = vld [vmem:[%s0] sm:$0xf]
  %v24 = vld [vmem:[%s0 + $0x4] sm:$0xf]
  %v25 = vld [vmem:[%s0 + $0x8] sm:$0xf]
  %v26 = vld [vmem:[%s0 + $0xc] sm:$0xf]
  %v27 = vld [vmem:[%s1] sm:$0xf]
  %v28 = vld [vmem:[%s1 + $0x4] sm:$0xf]
  %v29 = vld [vmem:[%s2] sm:$0x1]
  %v31 = vlaneseq
  %v32 = vshrl.u32 %v31, 7
  %v33 = vsub.s32 0, %v32
  %v34 = vrot.slane %v29, %v33
  %v40 = vunpack.c.l.b16 %v23
  %v41 = vunpack.c.l.b16 %v24
  %v42 = vunpack.c.l.b16 %v25
  %v43 = vunpack.c.l.b16 %v26
  %v44 = vpack.c.b16 %v41, %v40
  %v45 = vpack.c.b16 %v43, %v42
  %v48 = vunpack.c.l.b16 %v27
  %v49 = vunpack.c.l.b16 %v28
  %v50 = vpack.c.b16 %v49, %v48
  %vm52 = vcmask 130048
  %v54 = vsel %vm52, %v44, 0
  %v57 = vsel %vm52, %v45, 0
  %59 = vmatprep.subr.bf16.mxu0 0
  %60 = vmatpush1.bf16.msra.mxu0 0
  %61 = vmatprep.subr.bf16.mxu0 0
  %62 = vmatpush1.bf16.msra.mxu0 0
  %63 = vmatprep.subr.bf16.mxu0 0
  %64 = vmatpush1.bf16.msra.mxu0 0
  %65 = vmatprep.subr.bf16.mxu0 0
  %66 = vmatpush1.bf16.msra.mxu0 0
  %67 = vmatprep.subr.bf16.mxu0 0
  %68 = vmatpush1.bf16.msra.mxu0 0
  %69 = vmatprep.subr.bf16.mxu0 0
  %70 = vmatpush1.bf16.msra.mxu0 0
  %71 = vmatprep.subr.bf16.mxu0 0
  %72 = vmatpush1.bf16.msra.mxu0 0
  %73 = vmatprep.subr.bf16.mxu0 0
  %74 = vmatpush1.bf16.msra.mxu0 %v50
  %75 = vmatprep.subr.bf16.mxu0 0
  %76 = vmatpush2.bf16.msra.mxu0 0
  %77 = vmatprep.subr.bf16.mxu0 0
  %78 = vmatpush2.bf16.msra.mxu0 0
  %79 = vmatprep.subr.bf16.mxu0 0
  %80 = vmatpush2.bf16.msra.mxu0 0
  %81 = vmatprep.subr.bf16.mxu0 0
  %82 = vmatpush2.bf16.msra.mxu0 0
  %83 = vmatprep.subr.bf16.mxu0 0
  %84 = vmatpush2.bf16.msra.mxu0 0
  %85 = vmatprep.subr.bf16.mxu0 0
  %86 = vmatpush2.bf16.msra.mxu0 0
  %87 = vmatprep.subr.bf16.mxu0 0
  %88 = vmatpush2.bf16.msra.mxu0 0
  %89 = vmatprep.subr.bf16.mxu0 0
  %90 = vmatpush2.bf16.msra.mxu0 0
  %91 = vmatprep.mubr.bf16.mxu0 0
  %92 = vmatmul.mubr.bf16.gmra.mxu0 %v54
  %v93 = vpop.f32.mrf.mxu0
  %v94 = vadd.f32 %v34, %v93
  %v95 = vpop.f32.mrf.mxu0
  %v96 = vpop.f32.mrf.mxu0
  %v97 = vadd.f32 %v34, %v96
  %v98 = vpop.f32.mrf.mxu0
  %99 = vmatprep.mubr.bf16.mxu0 0
  %100 = vmatmul.mubr.bf16.gmra.mxu0 %v57
  %v101 = vpop.f32.mrf.mxu0
  %v102 = vadd.f32 %v34, %v101
  %v103 = vpop.f32.mrf.mxu0
  %v104 = vpop.f32.mrf.mxu0
  %v105 = vadd.f32 %v34, %v104
  %v106 = vpop.f32.mrf.mxu0
  %107 = vdwg.mxu0
  %v108 = vmax.f32 %v94, 0.0
  %v109 = vmax.f32 %v97, 0.0
  %v110 = vmax.f32 %v102, 0.0
  %v111 = vmax.f32 %v105, 0.0
  %v112 = vpack.c.bf16 %v109, %v108
  %v113 = vpack.c.bf16 %v111, %v110
  %v116 = vunpack.c.l.b16 %v112
  %v117 = vunpack.c.h.b16 %v112
  %v118 = vunpack.c.l.b16 %v113
  %v119 = vunpack.c.h.b16 %v113
  %v120 = vpack.c.b16 %v116, %v116
  %v121 = vpack.c.b16 %v117, %v117
  %v122 = vpack.c.b16 %v118, %v118
  %v123 = vpack.c.b16 %v119, %v119
  %vm128 = vcmask 60416
  %129 = vst.msk [vmem:[%s5] sm:$0xf] %vm128, %v120
  %130 = vst.msk [vmem:[%s5 + $0x4] sm:$0xf] %vm128, %v121
  %131 = vst.msk [vmem:[%s5 + $0x8] sm:$0xf] %vm128, %v122
  %132 = vst.msk [vmem:[%s5 + $0xc] sm:$0xf] %vm128, %v123
  %v133 = vld [vmem:[%s3] sm:$0xf]
  %v134 = vld [vmem:[%s3 + $0x4] sm:$0xf]
  %v135 = vld [vmem:[%s4] sm:$0x1]
  %v137 = vlaneseq
  %v138 = vshrl.u32 %v137, 7
  %v139 = vsub.s32 0, %v138
  %v140 = vrot.slane %v135, %v139
  %v144 = vunpack.c.l.b16 %v133
  %v145 = vunpack.c.l.b16 %v134
  %v146 = vpack.c.b16 %v145, %v144
  %148 = vmatprep.subr.bf16.mxu0 0
  %149 = vmatpush1.bf16.msra.mxu0 0
  %150 = vmatprep.subr.bf16.mxu0 0
  %151 = vmatpush1.bf16.msra.mxu0 0
  %152 = vmatprep.subr.bf16.mxu0 0
  %153 = vmatpush1.bf16.msra.mxu0 0
  %154 = vmatprep.subr.bf16.mxu0 0
  %155 = vmatpush1.bf16.msra.mxu0 0
  %156 = vmatprep.subr.bf16.mxu0 0
  %157 = vmatpush1.bf16.msra.mxu0 0
  %158 = vmatprep.subr.bf16.mxu0 0
  %159 = vmatpush1.bf16.msra.mxu0 0
  %160 = vmatprep.subr.bf16.mxu0 0
  %161 = vmatpush1.bf16.msra.mxu0 0
  %162 = vmatprep.subr.bf16.mxu0 0
  %163 = vmatpush1.bf16.msra.mxu0 %v146
  %164 = vmatprep.subr.bf16.mxu0 0
  %165 = vmatpush2.bf16.msra.mxu0 0
  %166 = vmatprep.subr.bf16.mxu0 0
  %167 = vmatpush2.bf16.msra.mxu0 0
  %168 = vmatprep.subr.bf16.mxu0 0
  %169 = vmatpush2.bf16.msra.mxu0 0
  %170 = vmatprep.subr.bf16.mxu0 0
  %171 = vmatpush2.bf16.msra.mxu0 0
  %172 = vmatprep.subr.bf16.mxu0 0
  %173 = vmatpush2.bf16.msra.mxu0 0
  %174 = vmatprep.subr.bf16.mxu0 0
  %175 = vmatpush2.bf16.msra.mxu0 0
  %176 = vmatprep.subr.bf16.mxu0 0
  %177 = vmatpush2.bf16.msra.mxu0 0
  %178 = vmatprep.subr.bf16.mxu0 0
  %179 = vmatpush2.bf16.msra.mxu0 0
  %180 = vmatprep.mubr.bf16.mxu0 0
  %181 = vmatmul.mubr.bf16.gmra.mxu0 %v54
  %v182 = vpop.f32.mrf.mxu0
  %v183 = vadd.f32 %v140, %v182
  %v184 = vpop.f32.mrf.mxu0
  %v185 = vpop.f32.mrf.mxu0
  %v186 = vadd.f32 %v140, %v185
  %v187 = vpop.f32.mrf.mxu0
  %188 = vmatprep.mubr.bf16.mxu0 0
  %189 = vmatmul.mubr.bf16.gmra.mxu0 %v57
  %v190 = vpop.f32.mrf.mxu0
  %v191 = vadd.f32 %v140, %v190
  %v192 = vpop.f32.mrf.mxu0
  %v193 = vpop.f32.mrf.mxu0
  %v194 = vadd.f32 %v140, %v193
  %v195 = vpop.f32.mrf.mxu0
  %196 = vdwg.mxu0
  %vm197 = vcmask 261120
  %198 = vst.msk [vmem:[%s6] sm:$0xff] %vm197, %v183
  %199 = vst.msk [vmem:[%s6 + $0x8] sm:$0xff] %vm197, %v186
  %200 = vst.msk [vmem:[%s6 + $0x10] sm:$0xff] %vm197, %v191
  %201 = vst.msk [vmem:[%s6 + $0x18] sm:$0xff] %vm197, %v194
  // Predicated region
  $region22: #{resnet_attr_forward.7} parent=0 // pred_check
    _
  $region23: #{resnet_attr_forward.7} parent=0 // pred_check_branch
    %203 = sbr.rel (0) target = $region25
  $region24: #{resnet_attr_forward.7} parent=0 // pred_region
    _
  $region25: #{resnet_attr_forward.7} parent=0 // pred_fallthru
    _
  // Predicated region
  $region26: #{resnet_attr_forward.7} parent=0 // pred_check
    _
  $region27: #{resnet_attr_forward.7} parent=0 // pred_check_branch
    %205 = sbr.rel (0) target = $region29
  $region28: #{resnet_attr_forward.7} parent=0 // pred_region
    _
  $region29: #{resnet_attr_forward.7} parent=0 // pred_fallthru
    _
  // Predicated region
  $region30: #{resnet_attr_forward.7} parent=0 // pred_check
    _
  $region31: #{resnet_attr_forward.7} parent=0 // pred_check_branch
    %207 = sbr.rel (0) target = $region33
  $region32: #{resnet_attr_forward.7} parent=0 // pred_region
    _
  $region33: #{resnet_attr_forward.7} parent=0 // pred_fallthru
    _
  // Predicated region
  $region34: #{resnet_attr_forward.7} parent=0 // pred_check
    _
  $region35: #{resnet_attr_forward.7} parent=0 // pred_check_branch
    %209 = sbr.rel (0) target = $region37
  $region36: #{resnet_attr_forward.7} parent=0 // pred_region
    _
  $region37: #{resnet_attr_forward.7} parent=0 // pred_fallthru
    _

// kernel: resnet_attr_forward.8
$region0: #{resnet_attr_forward.8}
  #allocation0 [shape = 'u32[]', space=smem, size = 0x4, offset = 0x4, fixed_abs, tag = 'smem constant byte address 0x4 - core index']
  #allocation1 [shape = 'u32[144,128]{1,0:T(1,128)}', space=vmem, size = 0x12000, scoped, tag = 'internal scratch']
  %s0 = inlined_call_operand.vmem [shape: bf16[32,72], index: 0, kind: input, shape index: {}]
  %s1 = inlined_call_operand.vmem [shape: bf16[72,8], index: 1, kind: input, shape index: {}]
  %s2 = inlined_call_operand.vmem [shape: f32[1,8], index: 2, kind: input, shape index: {}]
  %s3 = inlined_call_operand.vmem [shape: bf16[8,32], index: 3, kind: input, shape index: {}]
  %s4 = inlined_call_operand.vmem [shape: f32[1,32], index: 4, kind: input, shape index: {}]
  %s5 = inlined_call_operand.vmem [shape: f32[32,32], index: 5, kind: input, shape index: {}]
  %s6 = inlined_call_operand.vmem [shape: f32[2,32], index: 6, kind: input, shape index: {}]
  %s7 = inlined_call_operand.vmem [shape: f32[2,32], index: 7, kind: output, shape index: {}]
  %s8 = sld [smem:[#allocation0]]
  $region38: #{resnet_attr_forward.8} parent=0
    _
  %s10 = ssub.s32 1, %s8
  %s11 = scalar_select 0, %s10, %s8
  // Predicated region
  $region2: #{resnet_attr_forward.8} parent=0 // pred_check
    _
  $region3: #{resnet_attr_forward.8} parent=0 // pred_check_branch
    %13 = sbr.rel (0) target = $region5
  $region4: #{resnet_attr_forward.8} parent=0 // pred_region
    _
  $region5: #{resnet_attr_forward.8} parent=0 // pred_fallthru
    _
  // Predicated region
  $region6: #{resnet_attr_forward.8} parent=0 // pred_check
    _
  $region7: #{resnet_attr_forward.8} parent=0 // pred_check_branch
    %15 = sbr.rel (0) target = $region9
  $region8: #{resnet_attr_forward.8} parent=0 // pred_region
    _
  $region9: #{resnet_attr_forward.8} parent=0 // pred_fallthru
    _
  // Predicated region
  $region10: #{resnet_attr_forward.8} parent=0 // pred_check
    _
  $region11: #{resnet_attr_forward.8} parent=0 // pred_check_branch
    %17 = sbr.rel (0) target = $region13
  $region12: #{resnet_attr_forward.8} parent=0 // pred_region
    _
  $region13: #{resnet_attr_forward.8} parent=0 // pred_fallthru
    _
  // Predicated region
  $region14: #{resnet_attr_forward.8} parent=0 // pred_check
    _
  $region15: #{resnet_attr_forward.8} parent=0 // pred_check_branch
    %19 = sbr.rel (0) target = $region17
  $region16: #{resnet_attr_forward.8} parent=0 // pred_region
    _
  $region17: #{resnet_attr_forward.8} parent=0 // pred_fallthru
    _
  // Predicated region
  $region18: #{resnet_attr_forward.8} parent=0 // pred_check
    _
  $region19: #{resnet_attr_forward.8} parent=0 // pred_check_branch
    %21 = sbr.rel (0) target = $region21
  $region20: #{resnet_attr_forward.8} parent=0 // pred_region
    _
  $region21: #{resnet_attr_forward.8} parent=0 // pred_fallthru
    _
  // Predicated region
  $region22: #{resnet_attr_forward.8} parent=0 // pred_check
    _
  $region23: #{resnet_attr_forward.8} parent=0 // pred_check_branch
    %23 = sbr.rel (0) target = $region25
  $region24: #{resnet_attr_forward.8} parent=0 // pred_region
    _
  $region25: #{resnet_attr_forward.8} parent=0 // pred_fallthru
    _
  // Predicated region
  $region26: #{resnet_attr_forward.8} parent=0 // pred_check
    _
  $region27: #{resnet_attr_forward.8} parent=0 // pred_check_branch
    %25 = sbr.rel (0) target = $region29
  $region28: #{resnet_attr_forward.8} parent=0 // pred_region
    _
  $region29: #{resnet_attr_forward.8} parent=0 // pred_fallthru
    _
  %v27 = vld [vmem:[%s0] sm:$0xf]
  %v28 = vld [vmem:[%s0 + $0x4] sm:$0xf]
  %v29 = vld [vmem:[%s0 + $0x8] sm:$0xf]
  %v30 = vld [vmem:[%s0 + $0xc] sm:$0xf]
  %v31 = vld [vmem:[%s1] sm:$0xf]
  %v32 = vld [vmem:[%s1 + $0x4] sm:$0xf]
  %v33 = vld [vmem:[%s1 + $0x8] sm:$0xf]
  %v34 = vld [vmem:[%s1 + $0xc] sm:$0xf]
  %v35 = vld [vmem:[%s1 + $0x10] sm:$0xf]
  %v36 = vld [vmem:[%s1 + $0x14] sm:$0xf]
  %v37 = vld [vmem:[%s1 + $0x18] sm:$0xf]
  %v38 = vld [vmem:[%s1 + $0x1c] sm:$0xf]
  %v39 = vld [vmem:[%s1 + $0x20] sm:$0xf]
  %v40 = vld [vmem:[%s2] sm:$0x1]
  %v42 = vlaneseq
  %v43 = vshrl.u32 %v42, 7
  %v44 = vsub.s32 0, %v43
  %v45 = vrot.slane %v40, %v44
  %v51 = vunpack.c.l.b16 %v27
  %v52 = vunpack.c.l.b16 %v28
  %v53 = vunpack.c.l.b16 %v29
  %v54 = vunpack.c.l.b16 %v30
  %v55 = vpack.c.b16 %v52, %v51
  %v56 = vpack.c.b16 %v54, %v53
  %v66 = vunpack.c.l.b16 %v31
  %v67 = vunpack.c.l.b16 %v32
  %v68 = vunpack.c.l.b16 %v33
  %v69 = vunpack.c.l.b16 %v34
  %v70 = vunpack.c.l.b16 %v35
  %v71 = vunpack.c.l.b16 %v36
  %v72 = vunpack.c.l.b16 %v37
  %v73 = vunpack.c.l.b16 %v38
  %v74 = vunpack.c.l.b16 %v39
  %v75 = vpack.c.b16 %v67, %v66
  %v76 = vpack.c.b16 %v69, %v68
  %v77 = vpack.c.b16 %v71, %v70
  %v78 = vpack.c.b16 %v73, %v72
  %v79 = vpack.c.b16 %v74, %v74
  %vm84 = vcmask 588800
  %v86 = vsel %vm84, %v55, 0
  %v89 = vsel %vm84, %v56, 0
  %vm91 = vcmask 1043456
  %v93 = vsel %vm91, %v79, 0
  %95 = vmatprep.subr.bf16.mxu0 0
  %96 = vmatpush1.bf16.msra.mxu0 0
  %97 = vmatprep.subr.bf16.mxu0 0
  %98 = vmatpush1.bf16.msra.mxu0 0
  %99 = vmatprep.subr.bf16.mxu0 0
  %100 = vmatpush1.bf16.msra.mxu0 0
  %101 = vmatprep.subr.bf16.mxu0 0
  %102 = vmatpush1.bf16.msra.mxu0 %v93
  %103 = vmatprep.subr.bf16.mxu0 0
  %104 = vmatpush1.bf16.msra.mxu0 %v78
  %105 = vmatprep.subr.bf16.mxu0 0
  %106 = vmatpush1.bf16.msra.mxu0 %v77
  %107 = vmatprep.subr.bf16.mxu0 0
  %108 = vmatpush1.bf16.msra.mxu0 %v76
  %109 = vmatprep.subr.bf16.mxu0 0
  %110 = vmatpush1.bf16.msra.mxu0 %v75
  %111 = vmatprep.subr.bf16.mxu0 0
  %112 = vmatpush2.bf16.msra.mxu0 0
  %113 = vmatprep.subr.bf16.mxu0 0
  %114 = vmatpush2.bf16.msra.mxu0 0
  %115 = vmatprep.subr.bf16.mxu0 0
  %116 = vmatpush2.bf16.msra.mxu0 0
  %117 = vmatprep.subr.bf16.mxu0 0
  %118 = vmatpush2.bf16.msra.mxu0 0
  %119 = vmatprep.subr.bf16.mxu0 0
  %120 = vmatpush2.bf16.msra.mxu0 0
  %121 = vmatprep.subr.bf16.mxu0 0
  %122 = vmatpush2.bf16.msra.mxu0 0
  %123 = vmatprep.subr.bf16.mxu0 0
  %124 = vmatpush2.bf16.msra.mxu0 0
  %125 = vmatprep.subr.bf16.mxu0 0
  %126 = vmatpush2.bf16.msra.mxu0 0
  %127 = vmatprep.mubr.bf16.mxu0 0
  %128 = vmatmul.mubr.bf16.gmra.mxu0 %v86
  %v129 = vpop.f32.mrf.mxu0
  %v130 = vadd.f32 %v45, %v129
  %v131 = vpop.f32.mrf.mxu0
  %v132 = vpop.f32.mrf.mxu0
  %v133 = vadd.f32 %v45, %v132
  %v134 = vpop.f32.mrf.mxu0
  %135 = vmatprep.mubr.bf16.mxu0 0
  %136 = vmatmul.mubr.bf16.gmra.mxu0 %v89
  %v137 = vpop.f32.mrf.mxu0
  %v138 = vadd.f32 %v45, %v137
  %v139 = vpop.f32.mrf.mxu0
  %v140 = vpop.f32.mrf.mxu0
  %v141 = vadd.f32 %v45, %v140
  %v142 = vpop.f32.mrf.mxu0
  %143 = vdwg.mxu0
  %v144 = vmax.f32 %v130, 0.0
  %v145 = vmax.f32 %v133, 0.0
  %v146 = vmax.f32 %v138, 0.0
  %v147 = vmax.f32 %v141, 0.0
  %v148 = vpack.c.bf16 %v145, %v144
  %v149 = vpack.c.bf16 %v147, %v146
  %v150 = vld [vmem:[%s3] sm:$0xf]
  %v151 = vld [vmem:[%s4] sm:$0x1]
  %v153 = vlaneseq
  %v154 = vshrl.u32 %v153, 7
  %v155 = vsub.s32 0, %v154
  %v156 = vrot.slane %v151, %v155
  %vm158 = vcmask 64512
  %v160 = vsel %vm158, %v148, 0
  %v163 = vsel %vm158, %v149, 0
  %v166 = vsel %vm91, %v150, 0
  %168 = vmatprep.subr.bf16.mxu0 0
  %169 = vmatpush1.bf16.msra.mxu0 0
  %170 = vmatprep.subr.bf16.mxu0 0
  %171 = vmatpush1.bf16.msra.mxu0 0
  %172 = vmatprep.subr.bf16.mxu0 0
  %173 = vmatpush1.bf16.msra.mxu0 0
  %174 = vmatprep.subr.bf16.mxu0 0
  %175 = vmatpush1.bf16.msra.mxu0 0
  %176 = vmatprep.subr.bf16.mxu0 0
  %177 = vmatpush1.bf16.msra.mxu0 0
  %178 = vmatprep.subr.bf16.mxu0 0
  %179 = vmatpush1.bf16.msra.mxu0 0
  %180 = vmatprep.subr.bf16.mxu0 0
  %181 = vmatpush1.bf16.msra.mxu0 0
  %182 = vmatprep.subr.bf16.mxu0 0
  %183 = vmatpush1.bf16.msra.mxu0 %v166
  %184 = vmatprep.subr.bf16.mxu0 0
  %185 = vmatpush2.bf16.msra.mxu0 0
  %186 = vmatprep.subr.bf16.mxu0 0
  %187 = vmatpush2.bf16.msra.mxu0 0
  %188 = vmatprep.subr.bf16.mxu0 0
  %189 = vmatpush2.bf16.msra.mxu0 0
  %190 = vmatprep.subr.bf16.mxu0 0
  %191 = vmatpush2.bf16.msra.mxu0 0
  %192 = vmatprep.subr.bf16.mxu0 0
  %193 = vmatpush2.bf16.msra.mxu0 0
  %194 = vmatprep.subr.bf16.mxu0 0
  %195 = vmatpush2.bf16.msra.mxu0 0
  %196 = vmatprep.subr.bf16.mxu0 0
  %197 = vmatpush2.bf16.msra.mxu0 0
  %198 = vmatprep.subr.bf16.mxu0 0
  %199 = vmatpush2.bf16.msra.mxu0 0
  %200 = vmatprep.mubr.bf16.mxu0 0
  %201 = vmatmul.mubr.bf16.gmra.mxu0 %v160
  %v202 = vpop.f32.mrf.mxu0
  %v203 = vadd.f32 %v156, %v202
  %v204 = vpop.f32.mrf.mxu0
  %v205 = vpop.f32.mrf.mxu0
  %v206 = vadd.f32 %v156, %v205
  %v207 = vpop.f32.mrf.mxu0
  %208 = vmatprep.mubr.bf16.mxu0 0
  %209 = vmatmul.mubr.bf16.gmra.mxu0 %v163
  %v210 = vpop.f32.mrf.mxu0
  %v211 = vadd.f32 %v156, %v210
  %v212 = vpop.f32.mrf.mxu0
  %v213 = vpop.f32.mrf.mxu0
  %v214 = vadd.f32 %v156, %v213
  %v215 = vpop.f32.mrf.mxu0
  %216 = vdwg.mxu0
  %v217 = vld [vmem:[%s5] sm:$0xff]
  %v218 = vld [vmem:[%s5 + $0x8] sm:$0xff]
  %v219 = vld [vmem:[%s5 + $0x10] sm:$0xff]
  %v220 = vld [vmem:[%s5 + $0x18] sm:$0xff]
  %v221 = vadd.f32 %v203, %v217
  %v222 = vadd.f32 %v206, %v218
  %v223 = vadd.f32 %v211, %v219
  %v224 = vadd.f32 %v214, %v220
  %v225 = vmax.f32 %v221, 0.0
  %v226 = vmax.f32 %v222, 0.0
  %v227 = vmax.f32 %v223, 0.0
  %v228 = vmax.f32 %v224, 0.0
  %v229 = vld [vmem:[%s6] sm:$0x3]
  %vm230 = vcmask 261120
  %v232 = vsel %vm230, %v229, 0
  %234 = vmatprep.subr.mxu0 0.0
  %235 = vmatpush1.msra.mxu0 0.0
  %236 = vmatprep.subr.mxu0 0.0
  %237 = vmatpush1.msra.mxu0 0.0
  %238 = vmatprep.subr.mxu0 0.0
  %239 = vmatpush1.msra.mxu0 0.0
  %240 = vmatprep.subr.mxu0 0.0
  %241 = vmatpush1.msra.mxu0 0.0
  %242 = vmatprep.subr.mxu0 0.0
  %243 = vmatpush1.msra.mxu0 0.0
  %244 = vmatprep.subr.mxu0 0.0
  %245 = vmatpush1.msra.mxu0 0.0
  %246 = vmatprep.subr.mxu0 0.0
  %247 = vmatpush1.msra.mxu0 0.0
  %248 = vmatprep.subr.mxu0 0.0
  %249 = vmatpush1.msra.mxu0 0.0
  %250 = vmatprep.subr.mxu0 0.0
  %251 = vmatpush1.msra.mxu0 0.0
  %252 = vmatprep.subr.mxu0 0.0
  %253 = vmatpush1.msra.mxu0 0.0
  %254 = vmatprep.subr.mxu0 0.0
  %255 = vmatpush1.msra.mxu0 0.0
  %256 = vmatprep.subr.mxu0 0.0
  %257 = vmatpush1.msra.mxu0 0.0
  %258 = vmatprep.subr.mxu0 0.0
  %259 = vmatpush1.msra.mxu0 %v228
  %260 = vmatprep.subr.mxu0 0.0
  %261 = vmatpush1.msra.mxu0 %v227
  %262 = vmatprep.subr.mxu0 0.0
  %263 = vmatpush1.msra.mxu0 %v226
  %264 = vmatprep.subr.mxu0 0.0
  %265 = vmatpush1.msra.mxu0 %v225
  %266 = vmatprep.subr.mxu0 0.0
  %267 = vmatpush2.msra.mxu0 0.0
  %268 = vmatprep.subr.mxu0 0.0
  %269 = vmatpush2.msra.mxu0 0.0
  %270 = vmatprep.subr.mxu0 0.0
  %271 = vmatpush2.msra.mxu0 0.0
  %272 = vmatprep.subr.mxu0 0.0
  %273 = vmatpush2.msra.mxu0 0.0
  %274 = vmatprep.subr.mxu0 0.0
  %275 = vmatpush2.msra.mxu0 0.0
  %276 = vmatprep.subr.mxu0 0.0
  %277 = vmatpush2.msra.mxu0 0.0
  %278 = vmatprep.subr.mxu0 0.0
  %279 = vmatpush2.msra.mxu0 0.0
  %280 = vmatprep.subr.mxu0 0.0
  %281 = vmatpush2.msra.mxu0 0.0
  %282 = vmatprep.subr.mxu0 0.0
  %283 = vmatpush2.msra.mxu0 0.0
  %284 = vmatprep.subr.mxu0 0.0
  %285 = vmatpush2.msra.mxu0 0.0
  %286 = vmatprep.subr.mxu0 0.0
  %287 = vmatpush2.msra.mxu0 0.0
  %288 = vmatprep.subr.mxu0 0.0
  %289 = vmatpush2.msra.mxu0 0.0
  %290 = vmatprep.subr.mxu0 0.0
  %291 = vmatpush2.msra.mxu0 0.0
  %292 = vmatprep.subr.mxu0 0.0
  %293 = vmatpush2.msra.mxu0 0.0
  %294 = vmatprep.subr.mxu0 0.0
  %295 = vmatpush2.msra.mxu0 0.0
  %296 = vmatprep.subr.mxu0 0.0
  %297 = vmatpush2.msra.mxu0 0.0
  %298 = vmatprep.mubr.f32.mxu0 0.0
  %299 = vmatmul.mubr.f32.gmra.mxu0 %v232
  %v300 = vpop.f32.mrf.mxu0
  %v301 = vadd.f32 0.0, %v300
  %v302 = vpop.f32.mrf.mxu0
  %303 = vdwg.mxu0
  %vm304 = vcmask 254976
  %305 = vst.msk [vmem:[%s7] sm:$0x3] %vm304, %v301
  // Predicated region
  $region30: #{resnet_attr_forward.8} parent=0 // pred_check
    _
  $region31: #{resnet_attr_forward.8} parent=0 // pred_check_branch
    %307 = sbr.rel (0) target = $region33
  $region32: #{resnet_attr_forward.8} parent=0 // pred_region
    _
  $region33: #{resnet_attr_forward.8} parent=0 // pred_fallthru
    _
  // Predicated region
  $region34: #{resnet_attr_forward.8} parent=0 // pred_check
    _
  $region35: #{resnet_attr_forward.8} parent=0 // pred_check_branch
    %309 = sbr.rel (0) target = $region37
  $region36: #{resnet_attr_forward.8} parent=0 // pred_region
    _
  $region37: #{resnet_attr_forward.8} parent=0 // pred_fallthru
    _

// kernel: resnet_attr_forward.9
$region0: #{resnet_attr_forward.9}
  #allocation0 [shape = 'u32[]', space=smem, size = 0x4, offset = 0x4, fixed_abs, tag = 'smem constant byte address 0x4 - core index']
  #allocation1 [shape = 'u32[144,128]{1,0:T(1,128)}', space=vmem, size = 0x12000, scoped, tag = 'internal scratch']
  %s0 = inlined_call_operand.vmem [shape: bf16[2,32], index: 0, kind: input, shape index: {}]
  %s1 = inlined_call_operand.vmem [shape: bf16[32,64], index: 1, kind: input, shape index: {}]
  %s2 = inlined_call_operand.vmem [shape: f32[1,64], index: 2, kind: input, shape index: {}]
  %s3 = inlined_call_operand.vmem [shape: bf16[64,64], index: 3, kind: input, shape index: {}]
  %s4 = inlined_call_operand.vmem [shape: f32[1,64], index: 4, kind: input, shape index: {}]
  %s5 = inlined_call_operand.vmem [shape: bf16[64,2], index: 5, kind: input, shape index: {}]
  %s6 = inlined_call_operand.vmem [shape: f32[1,2], index: 6, kind: input, shape index: {}]
  %s7 = inlined_call_operand.hbm [shape: f32[2,2], index: 7, kind: output, shape index: {}]
  %s8 = sld [smem:[#allocation0]]
  $region38: #{resnet_attr_forward.9} parent=0
    _
  %s10 = ssub.s32 1, %s8
  %s11 = scalar_select 0, %s10, %s8
  $region1: #{resnet_attr_forward.9} parent=0
    #allocation2 [shape = 'u8[1024]{0}', space=vmem, size = 0x400, scoped, tag = 'output window, operand 0, single buffered']
    #allocation3 [shape = 's32[1]{0}', space=sflag, size = 0x4, scoped, tag = 'scoped memory for resnet_attr_forward.9']
    %12 = vsyncpa [#allocation3], 0
    // Predicated region
    $region2: #{resnet_attr_forward.9} parent=1 // pred_check
      _
    $region3: #{resnet_attr_forward.9} parent=1 // pred_check_branch
      %14 = sbr.rel (0) target = $region5
    $region4: #{resnet_attr_forward.9} parent=1 // pred_region
      _
    $region5: #{resnet_attr_forward.9} parent=1 // pred_fallthru
      _
    // Predicated region
    $region6: #{resnet_attr_forward.9} parent=1 // pred_check
      _
    $region7: #{resnet_attr_forward.9} parent=1 // pred_check_branch
      %16 = sbr.rel (0) target = $region9
    $region8: #{resnet_attr_forward.9} parent=1 // pred_region
      _
    $region9: #{resnet_attr_forward.9} parent=1 // pred_fallthru
      _
    // Predicated region
    $region10: #{resnet_attr_forward.9} parent=1 // pred_check
      _
    $region11: #{resnet_attr_forward.9} parent=1 // pred_check_branch
      %18 = sbr.rel (0) target = $region13
    $region12: #{resnet_attr_forward.9} parent=1 // pred_region
      _
    $region13: #{resnet_attr_forward.9} parent=1 // pred_fallthru
      _
    // Predicated region
    $region14: #{resnet_attr_forward.9} parent=1 // pred_check
      _
    $region15: #{resnet_attr_forward.9} parent=1 // pred_check_branch
      %20 = sbr.rel (0) target = $region17
    $region16: #{resnet_attr_forward.9} parent=1 // pred_region
      _
    $region17: #{resnet_attr_forward.9} parent=1 // pred_fallthru
      _
    // Predicated region
    $region18: #{resnet_attr_forward.9} parent=1 // pred_check
      _
    $region19: #{resnet_attr_forward.9} parent=1 // pred_check_branch
      %22 = sbr.rel (0) target = $region21
    $region20: #{resnet_attr_forward.9} parent=1 // pred_region
      _
    $region21: #{resnet_attr_forward.9} parent=1 // pred_fallthru
      _
    // Predicated region
    $region22: #{resnet_attr_forward.9} parent=1 // pred_check
      _
    $region23: #{resnet_attr_forward.9} parent=1 // pred_check_branch
      %24 = sbr.rel (0) target = $region25
    $region24: #{resnet_attr_forward.9} parent=1 // pred_region
      _
    $region25: #{resnet_attr_forward.9} parent=1 // pred_fallthru
      _
    // Predicated region
    $region26: #{resnet_attr_forward.9} parent=1 // pred_check
      _
    $region27: #{resnet_attr_forward.9} parent=1 // pred_check_branch
      %26 = sbr.rel (0) target = $region29
    $region28: #{resnet_attr_forward.9} parent=1 // pred_region
      _
    $region29: #{resnet_attr_forward.9} parent=1 // pred_fallthru
      _
    %v28 = vld [vmem:[%s0] sm:$0x1]
    %v29 = vld [vmem:[%s1] sm:$0xf]
    %v30 = vld [vmem:[%s1 + $0x4] sm:$0xf]
    %v31 = vld [vmem:[%s1 + $0x8] sm:$0xf]
    %v32 = vld [vmem:[%s1 + $0xc] sm:$0xf]
    %v33 = vld [vmem:[%s2] sm:$0x1]
    %v35 = vlaneseq
    %v36 = vshrl.u32 %v35, 7
    %v37 = vsub.s32 0, %v36
    %v38 = vrot.slane %v33, %v37
    %v44 = vunpack.c.l.b16 %v29
    %v45 = vunpack.c.l.b16 %v30
    %v46 = vunpack.c.l.b16 %v31
    %v47 = vunpack.c.l.b16 %v32
    %v48 = vpack.c.b16 %v45, %v44
    %v49 = vpack.c.b16 %v47, %v46
    %vm52 = vcmask 261120
    %v54 = vsel %vm52, %v28, 0
    %56 = vmatprep.subr.bf16.mxu0 0
    %57 = vmatpush1.bf16.msra.mxu0 0
    %58 = vmatprep.subr.bf16.mxu0 0
    %59 = vmatpush1.bf16.msra.mxu0 0
    %60 = vmatprep.subr.bf16.mxu0 0
    %61 = vmatpush1.bf16.msra.mxu0 0
    %62 = vmatprep.subr.bf16.mxu0 0
    %63 = vmatpush1.bf16.msra.mxu0 0
    %64 = vmatprep.subr.bf16.mxu0 0
    %65 = vmatpush1.bf16.msra.mxu0 0
    %66 = vmatprep.subr.bf16.mxu0 0
    %67 = vmatpush1.bf16.msra.mxu0 0
    %68 = vmatprep.subr.bf16.mxu0 0
    %69 = vmatpush1.bf16.msra.mxu0 %v49
    %70 = vmatprep.subr.bf16.mxu0 0
    %71 = vmatpush1.bf16.msra.mxu0 %v48
    %72 = vmatprep.subr.bf16.mxu0 0
    %73 = vmatpush2.bf16.msra.mxu0 0
    %74 = vmatprep.subr.bf16.mxu0 0
    %75 = vmatpush2.bf16.msra.mxu0 0
    %76 = vmatprep.subr.bf16.mxu0 0
    %77 = vmatpush2.bf16.msra.mxu0 0
    %78 = vmatprep.subr.bf16.mxu0 0
    %79 = vmatpush2.bf16.msra.mxu0 0
    %80 = vmatprep.subr.bf16.mxu0 0
    %81 = vmatpush2.bf16.msra.mxu0 0
    %82 = vmatprep.subr.bf16.mxu0 0
    %83 = vmatpush2.bf16.msra.mxu0 0
    %84 = vmatprep.subr.bf16.mxu0 0
    %85 = vmatpush2.bf16.msra.mxu0 0
    %86 = vmatprep.subr.bf16.mxu0 0
    %87 = vmatpush2.bf16.msra.mxu0 0
    %88 = vmatprep.mubr.bf16.mxu0 0
    %89 = vmatmul.mubr.bf16.gmra.mxu0 %v54
    %v90 = vpop.f32.mrf.mxu0
    %v91 = vadd.f32 %v38, %v90
    %v92 = vpop.f32.mrf.mxu0
    %v93 = vpop.f32.mrf.mxu0
    %v94 = vpop.f32.mrf.mxu0
    %95 = vdwg.mxu0
    %v96 = vmul.f32 %v91, 0.01
    %v97 = vmax.f32 %v91, %v96
    %v98 = vpack.c.bf16 %v97, %v97
    %v99 = vld [vmem:[%s3] sm:$0xf]
    %v100 = vld [vmem:[%s3 + $0x4] sm:$0xf]
    %v101 = vld [vmem:[%s3 + $0x8] sm:$0xf]
    %v102 = vld [vmem:[%s3 + $0xc] sm:$0xf]
    %v103 = vld [vmem:[%s3 + $0x10] sm:$0xf]
    %v104 = vld [vmem:[%s3 + $0x14] sm:$0xf]
    %v105 = vld [vmem:[%s3 + $0x18] sm:$0xf]
    %v106 = vld [vmem:[%s3 + $0x1c] sm:$0xf]
    %v107 = vld [vmem:[%s4] sm:$0x1]
    %v109 = vlaneseq
    %v110 = vshrl.u32 %v109, 7
    %v111 = vsub.s32 0, %v110
    %v112 = vrot.slane %v107, %v111
    %v122 = vunpack.c.l.b16 %v99
    %v123 = vunpack.c.l.b16 %v100
    %v124 = vunpack.c.l.b16 %v101
    %v125 = vunpack.c.l.b16 %v102
    %v126 = vunpack.c.l.b16 %v103
    %v127 = vunpack.c.l.b16 %v104
    %v128 = vunpack.c.l.b16 %v105
    %v129 = vunpack.c.l.b16 %v106
    %v130 = vpack.c.b16 %v123, %v122
    %v131 = vpack.c.b16 %v125, %v124
    %v132 = vpack.c.b16 %v127, %v126
    %v133 = vpack.c.b16 %v129, %v128
    %vm138 = vcmask 523264
    %v140 = vsel %vm138, %v98, 0
    %142 = vmatprep.subr.bf16.mxu0 0
    %143 = vmatpush1.bf16.msra.mxu0 0
    %144 = vmatprep.subr.bf16.mxu0 0
    %145 = vmatpush1.bf16.msra.mxu0 0
    %146 = vmatprep.subr.bf16.mxu0 0
    %147 = vmatpush1.bf16.msra.mxu0 0
    %148 = vmatprep.subr.bf16.mxu0 0
    %149 = vmatpush1.bf16.msra.mxu0 0
    %150 = vmatprep.subr.bf16.mxu0 0
    %151 = vmatpush1.bf16.msra.mxu0 %v133
    %152 = vmatprep.subr.bf16.mxu0 0
    %153 = vmatpush1.bf16.msra.mxu0 %v132
    %154 = vmatprep.subr.bf16.mxu0 0
    %155 = vmatpush1.bf16.msra.mxu0 %v131
    %156 = vmatprep.subr.bf16.mxu0 0
    %157 = vmatpush1.bf16.msra.mxu0 %v130
    %158 = vmatprep.subr.bf16.mxu0 0
    %159 = vmatpush2.bf16.msra.mxu0 0
    %160 = vmatprep.subr.bf16.mxu0 0
    %161 = vmatpush2.bf16.msra.mxu0 0
    %162 = vmatprep.subr.bf16.mxu0 0
    %163 = vmatpush2.bf16.msra.mxu0 0
    %164 = vmatprep.subr.bf16.mxu0 0
    %165 = vmatpush2.bf16.msra.mxu0 0
    %166 = vmatprep.subr.bf16.mxu0 0
    %167 = vmatpush2.bf16.msra.mxu0 0
    %168 = vmatprep.subr.bf16.mxu0 0
    %169 = vmatpush2.bf16.msra.mxu0 0
    %170 = vmatprep.subr.bf16.mxu0 0
    %171 = vmatpush2.bf16.msra.mxu0 0
    %172 = vmatprep.subr.bf16.mxu0 0
    %173 = vmatpush2.bf16.msra.mxu0 0
    %174 = vmatprep.mubr.bf16.mxu0 0
    %175 = vmatmul.mubr.bf16.gmra.mxu0 %v140
    %v176 = vpop.f32.mrf.mxu0
    %v177 = vadd.f32 %v112, %v176
    %v178 = vpop.f32.mrf.mxu0
    %v179 = vpop.f32.mrf.mxu0
    %v180 = vpop.f32.mrf.mxu0
    %181 = vdwg.mxu0
    %v182 = vmul.f32 %v177, 0.01
    %v183 = vmax.f32 %v177, %v182
    %v184 = vpack.c.bf16 %v183, %v183
    %v185 = vld [vmem:[%s5] sm:$0xf]
    %v186 = vld [vmem:[%s5 + $0x4] sm:$0xf]
    %v187 = vld [vmem:[%s5 + $0x8] sm:$0xf]
    %v188 = vld [vmem:[%s5 + $0xc] sm:$0xf]
    %v189 = vld [vmem:[%s5 + $0x10] sm:$0xf]
    %v190 = vld [vmem:[%s5 + $0x14] sm:$0xf]
    %v191 = vld [vmem:[%s5 + $0x18] sm:$0xf]
    %v192 = vld [vmem:[%s5 + $0x1c] sm:$0xf]
    %v193 = vld [vmem:[%s6] sm:$0x1]
    %v195 = vlaneseq
    %v196 = vshrl.u32 %v195, 7
    %v197 = vsub.s32 0, %v196
    %v198 = vrot.slane %v193, %v197
    %v208 = vunpack.c.l.b16 %v185
    %v209 = vunpack.c.l.b16 %v186
    %v210 = vunpack.c.l.b16 %v187
    %v211 = vunpack.c.l.b16 %v188
    %v212 = vunpack.c.l.b16 %v189
    %v213 = vunpack.c.l.b16 %v190
    %v214 = vunpack.c.l.b16 %v191
    %v215 = vunpack.c.l.b16 %v192
    %v216 = vpack.c.b16 %v209, %v208
    %v217 = vpack.c.b16 %v211, %v210
    %v218 = vpack.c.b16 %v213, %v212
    %v219 = vpack.c.b16 %v215, %v214
    %v225 = vsel %vm138, %v184, 0
    %227 = vmatprep.subr.bf16.mxu0 0
    %228 = vmatpush1.bf16.msra.mxu0 0
    %229 = vmatprep.subr.bf16.mxu0 0
    %230 = vmatpush1.bf16.msra.mxu0 0
    %231 = vmatprep.subr.bf16.mxu0 0
    %232 = vmatpush1.bf16.msra.mxu0 0
    %233 = vmatprep.subr.bf16.mxu0 0
    %234 = vmatpush1.bf16.msra.mxu0 0
    %235 = vmatprep.subr.bf16.mxu0 0
    %236 = vmatpush1.bf16.msra.mxu0 %v219
    %237 = vmatprep.subr.bf16.mxu0 0
    %238 = vmatpush1.bf16.msra.mxu0 %v218
    %239 = vmatprep.subr.bf16.mxu0 0
    %240 = vmatpush1.bf16.msra.mxu0 %v217
    %241 = vmatprep.subr.bf16.mxu0 0
    %242 = vmatpush1.bf16.msra.mxu0 %v216
    %243 = vmatprep.subr.bf16.mxu0 0
    %244 = vmatpush2.bf16.msra.mxu0 0
    %245 = vmatprep.subr.bf16.mxu0 0
    %246 = vmatpush2.bf16.msra.mxu0 0
    %247 = vmatprep.subr.bf16.mxu0 0
    %248 = vmatpush2.bf16.msra.mxu0 0
    %249 = vmatprep.subr.bf16.mxu0 0
    %250 = vmatpush2.bf16.msra.mxu0 0
    %251 = vmatprep.subr.bf16.mxu0 0
    %252 = vmatpush2.bf16.msra.mxu0 0
    %253 = vmatprep.subr.bf16.mxu0 0
    %254 = vmatpush2.bf16.msra.mxu0 0
    %255 = vmatprep.subr.bf16.mxu0 0
    %256 = vmatpush2.bf16.msra.mxu0 0
    %257 = vmatprep.subr.bf16.mxu0 0
    %258 = vmatpush2.bf16.msra.mxu0 0
    %259 = vmatprep.mubr.bf16.mxu0 0
    %260 = vmatmul.mubr.bf16.gmra.mxu0 %v225
    %v261 = vpop.f32.mrf.mxu0
    %v262 = vadd.f32 %v198, %v261
    %v263 = vpop.f32.mrf.mxu0
    %v264 = vpop.f32.mrf.mxu0
    %v265 = vpop.f32.mrf.mxu0
    %266 = vdwg.mxu0
    %vm267 = vcmask 9216
    %268 = vst.msk [vmem:[#allocation2] sm:$0x3] %vm267, %v262
    // Predicated region
    $region30: #{resnet_attr_forward.9} parent=1 // pred_check
      _
    $region31: #{resnet_attr_forward.9} parent=1 // pred_check_branch
      %270 = sbr.rel (0) target = $region33
    $region32: #{resnet_attr_forward.9} parent=1 // pred_region
      %s272 = ssub.s32 32, 32
      %273 = vsyncadd [#allocation3], %s272
      %s275 = sshll.u32 [#allocation2], 4
      %s276 = int_to_ptr.vmem [resolvable:$true] %s275
      %278 = dma.vmem_to_hbm [thread:$0]  %s276, 32, %s7, [#allocation3]
    $region33: #{resnet_attr_forward.9} parent=1 // pred_fallthru
      _
    // Predicated region
    $region34: #{resnet_attr_forward.9} parent=1 // pred_check
      _
    $region35: #{resnet_attr_forward.9} parent=1 // pred_check_branch
      %280 = sbr.rel (0) target = $region37
    $region36: #{resnet_attr_forward.9} parent=1 // pred_region
      %281 = dma.done [#allocation3], 32
    $region37: #{resnet_attr_forward.9} parent=1 // pred_fallthru
      _
    %282 = vsyncpa [#allocation3], 1

</llo_original>
